<compile_context>
chip_gen: v7x
topology: tpu7x:2x2x1
jax: 0.10.0
libtpu: 0.0.40
codegen_flags: <defaults>
</compile_context>

<pallas_src>
import numpy as np
import jax
import jax.numpy as jnp
from jax.experimental import pallas as pl
from jax.experimental.pallas import tpu as pltpu

H = W = 14
HW = H * W            # 196
C_FEAT = 512          # resnet34 embedding size
C_RED = 36            # conv1 out channels
C_PW = 3              # pointwise out channels
D_FLAT = C_PW * HW    # 588
D_HID = 72
D_OUT = 36


def _head_kernel(feat_ref, bias_ref, w1_ref, b1_ref, w2f_ref,
                 w3_ref, b3_ref, w4_ref, b4_ref, out_ref, flat_s):
    bblk = out_ref.shape[0]
    w1 = w1_ref[...]                       # [36, 512]  bf16
    b1 = b1_ref[...]                       # [36, 1]    f32
    w2f = w2f_ref[...]                     # [3, 36]    f32

    # conv1 (1x1, 512 -> 36) + ReLU and pointwise (73 -> 3, tiled channels
    # folded into bias_ref) + ReLU, per sample of the block.
    for b in range(bblk):
        feat_b = feat_ref[b]                                     # [512, 196] bf16
        red = jnp.dot(w1, feat_b,
                      preferred_element_type=jnp.float32) + b1   # [36, 196]
        red = jnp.maximum(red, 0.0)
        comb = jnp.dot(w2f, red,
                       preferred_element_type=jnp.float32) + bias_ref[b]
        comb = jnp.maximum(comb, 0.0)                            # [3, 196]
        # NCHW channel-major flatten: row b of flat_s is [ch0 | ch1 | ch2].
        for p in range(C_PW):
            flat_s[b:b + 1, p * HW:(p + 1) * HW] = comb[p:p + 1, :]

    # Linear(588 -> 72) + ReLU and Linear(72 -> 36), batched over the block.
    flat = flat_s[...]                                           # [bblk, 588]
    h = jnp.dot(flat, w3_ref[...],
                preferred_element_type=jnp.float32) + b3_ref[...]
    h = jnp.maximum(h, 0.0)                                      # [bblk, 72]
    out_ref[...] = jnp.dot(h, w4_ref[...],
                           preferred_element_type=jnp.float32) + b4_ref[...]


def model_head_pallas(feat_nchw, search_info, query_left, params, *, block_b=8):
    B = feat_nchw.shape[0]
    bblk = min(block_b, B)
    b_pad = ((B + bblk - 1) // bblk) * bblk
    n_steps = b_pad // bblk

    # bf16 feature stream (dominant HBM traffic); accumulation stays in f32.
    feat2d = feat_nchw.reshape(B, C_FEAT, HW).astype(jnp.bfloat16)
    if b_pad != B:
        feat2d = jnp.pad(feat2d, ((0, b_pad - B), (0, 0), (0, 0)))

    w2 = params["pw_w"].reshape(C_PW, 2 * C_RED + 1).astype(jnp.float32)
    # The tiled search/query channels are spatially constant, so the pointwise
    # conv's response to them collapses (exactly, pre-ReLU) to one per-batch
    # [3] column: bias = W2_search @ s + W2_query * q + b2.
    bias = (search_info.astype(jnp.float32) @ w2[:, C_RED:2 * C_RED].T
            + query_left.astype(jnp.float32)[:, None] * w2[:, 2 * C_RED][None, :]
            + params["pw_b"].astype(jnp.float32)[None, :])       # [B, 3]
    bias = bias.reshape(B, C_PW, 1)
    if b_pad != B:
        bias = jnp.pad(bias, ((0, b_pad - B), (0, 0), (0, 0)))

    w1 = params["conv1_w"].reshape(C_RED, C_FEAT).astype(jnp.bfloat16)
    b1 = params["conv1_b"].reshape(C_RED, 1).astype(jnp.float32)
    w2f = w2[:, :C_RED]                                  # acts on reduced feats
    w3 = params["lin1_w"].astype(jnp.float32).T          # [588, 72], rows = c*196+s
    b3 = params["lin1_b"].reshape(1, D_HID).astype(jnp.float32)
    w4 = params["lin2_w"].astype(jnp.float32).T          # [72, 36]
    b4 = params["lin2_b"].reshape(1, D_OUT).astype(jnp.float32)

    grid_spec = pltpu.PrefetchScalarGridSpec(
        num_scalar_prefetch=0,
        grid=(n_steps,),
        in_specs=[
            pl.BlockSpec((bblk, C_FEAT, HW), lambda i: (i, 0, 0)),   # features
            pl.BlockSpec((bblk, C_PW, 1), lambda i: (i, 0, 0)),      # folded bias
            pl.BlockSpec((C_RED, C_FEAT), lambda i: (0, 0)),         # w1 (bf16)
            pl.BlockSpec((C_RED, 1), lambda i: (0, 0)),              # b1
            pl.BlockSpec((C_PW, C_RED), lambda i: (0, 0)),           # w2 (reduced part)
            pl.BlockSpec((D_FLAT, D_HID), lambda i: (0, 0)),         # lin1 weight^T
            pl.BlockSpec((1, D_HID), lambda i: (0, 0)),              # lin1 bias
            pl.BlockSpec((D_HID, D_OUT), lambda i: (0, 0)),          # lin2 weight^T
            pl.BlockSpec((1, D_OUT), lambda i: (0, 0)),              # lin2 bias
        ],
        out_specs=pl.BlockSpec((bblk, D_OUT), lambda i: (i, 0)),
        scratch_shapes=[pltpu.VMEM((bblk, D_FLAT), jnp.float32)],
    )

    out = pl.pallas_call(
        _head_kernel,
        out_shape=jax.ShapeDtypeStruct((b_pad, D_OUT), jnp.float32),
        grid_spec=grid_spec,
        compiler_params=pltpu.CompilerParams(
            dimension_semantics=("parallel",),
            vmem_limit_bytes=32 * 1024 * 1024),
    )(feat2d, bias, w1, b1, w2f, w3, b3, w4, b4)
    return out[:B]


def init_params(key):
    ks = jax.random.split(key, 8)
    s = 0.05
    return {
        "conv1_w": s * jax.random.normal(ks[0], (C_RED, C_FEAT, 1, 1), jnp.float32),
        "conv1_b": s * jax.random.normal(ks[1], (C_RED,), jnp.float32),
        "pw_w":    s * jax.random.normal(ks[2], (C_PW, 2 * C_RED + 1, 1, 1), jnp.float32),
        "pw_b":    s * jax.random.normal(ks[3], (C_PW,), jnp.float32),
        "lin1_w":  s * jax.random.normal(ks[4], (D_HID, D_FLAT), jnp.float32),
        "lin1_b":  s * jax.random.normal(ks[5], (D_HID,), jnp.float32),
        "lin2_w":  s * jax.random.normal(ks[6], (D_OUT, D_HID), jnp.float32),
        "lin2_b":  s * jax.random.normal(ks[7], (D_OUT,), jnp.float32),
    }


def ref_forward(feat, search_info, query_left, p):
    """Pure-numpy reference mirroring the PyTorch head exactly (f64)."""
    B = feat.shape[0]
    f = feat.astype(np.float64).reshape(B, C_FEAT, HW)
    w1 = p["conv1_w"].astype(np.float64).reshape(C_RED, C_FEAT)
    b1 = p["conv1_b"].astype(np.float64)
    w2 = p["pw_w"].astype(np.float64).reshape(C_PW, 2 * C_RED + 1)
    b2 = p["pw_b"].astype(np.float64)
    w3 = p["lin1_w"].astype(np.float64)
    b3 = p["lin1_b"].astype(np.float64)
    w4 = p["lin2_w"].astype(np.float64)
    b4 = p["lin2_b"].astype(np.float64)
    outs = []
    for b in range(B):
        reduced = np.maximum(w1 @ f[b] + b1[:, None], 0.0)                 # [36,196]
        stile = np.repeat(search_info[b].astype(np.float64)[:, None], HW, 1)
        qtile = np.full((1, HW), float(query_left[b]), dtype=np.float64)
        cat = np.concatenate([reduced, stile, qtile], axis=0)              # [73,196]
        comb = np.maximum(w2 @ cat + b2[:, None], 0.0)                     # [3,196]
        flat = comb.reshape(-1)                                            # [588]
        h = np.maximum(w3 @ flat + b3, 0.0)
        outs.append(w4 @ h + b4)
    return np.stack(outs, axis=0)


if __name__ == "__main__":
    key = jax.random.PRNGKey(0)
    k_feat, k_s, k_q, k_p = jax.random.split(key, 4)
    B = 2

    # ResNet34 trunk output stand-in (see TODO(synk) above): [B, 512, 14, 14]
    feat = jax.random.normal(k_feat, (B, C_FEAT, H, W), jnp.float32)
    search_info = jax.random.normal(k_s, (B, C_RED), jnp.float32)
    query_left = jax.random.normal(k_q, (B,), jnp.float32)
    params = init_params(k_p)

    logits = model_head_pallas(feat, search_info, query_left, params)
    logits = jax.block_until_ready(logits)
    assert logits.shape == (B, D_OUT)

    ref = ref_forward(np.asarray(feat), np.asarray(search_info),
                      np.asarray(query_left),
                      {k: np.asarray(v) for k, v in params.items()})
    # feature/conv1 stream is bf16 (f32 accumulation) -> slightly looser tol.
    np.testing.assert_allclose(np.asarray(logits), ref, rtol=2e-2, atol=2e-2)
    print("KERNEL_OK")
</pallas_src>

<mosaic_0001>
module attributes {stable_mosaic.version = 11 : i64} {
  func.func @_head_kernel(%arg0: i32, %arg1: memref<2x512x196xbf16, #tpu.memory_space<vmem>>, %arg2: memref<2x3x1xf32, #tpu.memory_space<vmem>>, %arg3: memref<36x512xbf16, #tpu.memory_space<vmem>>, %arg4: memref<36x1xf32, #tpu.memory_space<vmem>>, %arg5: memref<3x36xf32, #tpu.memory_space<vmem>>, %arg6: memref<588x72xf32, #tpu.memory_space<vmem>>, %arg7: memref<1x72xf32, #tpu.memory_space<vmem>>, %arg8: memref<72x36xf32, #tpu.memory_space<vmem>>, %arg9: memref<1x36xf32, #tpu.memory_space<vmem>>, %arg10: memref<2x36xf32, #tpu.memory_space<vmem>>, %arg11: memref<2x588xf32, #tpu.memory_space<vmem>>) attributes {dimension_semantics = [#tpu.dimension_semantics<parallel>], iteration_bounds = array<i64: 1>, scalar_prefetch = 0 : i64, scratch_operands = 1 : i64, tpu.core_type = #tpu.core_type<tc>, window_params = [{transform_indices = @transform_0, window_bounds = array<i64: 2, 512, 196>}, {transform_indices = @transform_1, window_bounds = array<i64: 2, 3, 1>}, {pipeline_mode = #tpu.pipeline_mode<synchronous>, transform_indices = @transform_2, window_bounds = array<i64: 36, 512>}, {pipeline_mode = #tpu.pipeline_mode<synchronous>, transform_indices = @transform_3, window_bounds = array<i64: 36, 1>}, {pipeline_mode = #tpu.pipeline_mode<synchronous>, transform_indices = @transform_4, window_bounds = array<i64: 3, 36>}, {pipeline_mode = #tpu.pipeline_mode<synchronous>, transform_indices = @transform_5, window_bounds = array<i64: 588, 72>}, {pipeline_mode = #tpu.pipeline_mode<synchronous>, transform_indices = @transform_6, window_bounds = array<i64: 1, 72>}, {pipeline_mode = #tpu.pipeline_mode<synchronous>, transform_indices = @transform_7, window_bounds = array<i64: 72, 36>}, {pipeline_mode = #tpu.pipeline_mode<synchronous>, transform_indices = @transform_8, window_bounds = array<i64: 1, 36>}, {transform_indices = @transform_9, window_bounds = array<i64: 2, 36>}]} {
    %c0 = arith.constant 0 : index
    %c0_0 = arith.constant 0 : index
    %0 = vector.load %arg3[%c0, %c0_0] : memref<36x512xbf16, #tpu.memory_space<vmem>>, vector<36x512xbf16>
    %c0_1 = arith.constant 0 : index
    %c0_2 = arith.constant 0 : index
    %1 = vector.load %arg4[%c0_1, %c0_2] : memref<36x1xf32, #tpu.memory_space<vmem>>, vector<36x1xf32>
    %c0_3 = arith.constant 0 : index
    %c0_4 = arith.constant 0 : index
    %2 = vector.load %arg5[%c0_3, %c0_4] : memref<3x36xf32, #tpu.memory_space<vmem>>, vector<3x36xf32>
    %c0_5 = arith.constant 0 : index
    %c0_6 = arith.constant 0 : index
    %c0_7 = arith.constant 0 : index
    %3 = vector.load %arg1[%c0_5, %c0_6, %c0_7] : memref<2x512x196xbf16, #tpu.memory_space<vmem>>, vector<1x512x196xbf16>
    %4 = vector.shape_cast %3 : vector<1x512x196xbf16> to vector<512x196xbf16>
    %cst = arith.constant dense<0.000000e+00> : vector<36x196xf32>
    %5 = tpu.matmul %0, %4, %cst {dimension_numbers = #tpu.dot_dimension_numbers<[1], [0], [0], [1], [0, 0, 1, 1], [], []>} : vector<36x512xbf16>, vector<512x196xbf16>, vector<36x196xf32> -> vector<36x196xf32>
    %6 = vector.broadcast %1 : vector<36x1xf32> to vector<36x196xf32>
    %7 = arith.addf %5, %6 : vector<36x196xf32>
    %cst_8 = arith.constant 0.000000e+00 : f32
    %8 = vector.broadcast %cst_8 : f32 to vector<36x196xf32>
    %9 = arith.maximumf %7, %8 : vector<36x196xf32>
    %cst_9 = arith.constant dense<0.000000e+00> : vector<3x196xf32>
    %10 = tpu.matmul %2, %9, %cst_9 {dimension_numbers = #tpu.dot_dimension_numbers<[1], [0], [0], [1], [0, 0, 1, 1], [], []>} : vector<3x36xf32>, vector<36x196xf32>, vector<3x196xf32> -> vector<3x196xf32>
    %c0_10 = arith.constant 0 : index
    %c0_11 = arith.constant 0 : index
    %c0_12 = arith.constant 0 : index
    %11 = vector.load %arg2[%c0_10, %c0_11, %c0_12] : memref<2x3x1xf32, #tpu.memory_space<vmem>>, vector<1x3x1xf32>
    %12 = vector.shape_cast %11 : vector<1x3x1xf32> to vector<3x1xf32>
    %13 = vector.broadcast %12 : vector<3x1xf32> to vector<3x196xf32>
    %14 = arith.addf %10, %13 : vector<3x196xf32>
    %cst_13 = arith.constant 0.000000e+00 : f32
    %15 = vector.broadcast %cst_13 : f32 to vector<3x196xf32>
    %16 = arith.maximumf %14, %15 : vector<3x196xf32>
    %17 = vector.extract_strided_slice %16 {offsets = [0, 0], sizes = [1, 196], strides = [1, 1]} : vector<3x196xf32> to vector<1x196xf32>
    %c0_14 = arith.constant 0 : index
    %c0_15 = arith.constant 0 : index
    %18 = vector.load %arg11[%c0_14, %c0_15] : memref<2x588xf32, #tpu.memory_space<vmem>>, vector<1x196xf32>
    tpu.vector_store %arg11[%c0_14, %c0_15], %17 {strides = array<i32>} : memref<2x588xf32, #tpu.memory_space<vmem>>, vector<1x196xf32>,
    %19 = vector.extract_strided_slice %16 {offsets = [1, 0], sizes = [1, 196], strides = [1, 1]} : vector<3x196xf32> to vector<1x196xf32>
    %c0_16 = arith.constant 0 : index
    %c196 = arith.constant 196 : index
    %20 = vector.load %arg11[%c0_16, %c196] : memref<2x588xf32, #tpu.memory_space<vmem>>, vector<1x196xf32>
    tpu.vector_store %arg11[%c0_16, %c196], %19 {strides = array<i32>} : memref<2x588xf32, #tpu.memory_space<vmem>>, vector<1x196xf32>,
    %21 = vector.extract_strided_slice %16 {offsets = [2, 0], sizes = [1, 196], strides = [1, 1]} : vector<3x196xf32> to vector<1x196xf32>
    %c0_17 = arith.constant 0 : index
    %c392 = arith.constant 392 : index
    %22 = vector.load %arg11[%c0_17, %c392] : memref<2x588xf32, #tpu.memory_space<vmem>>, vector<1x196xf32>
    tpu.vector_store %arg11[%c0_17, %c392], %21 {strides = array<i32>} : memref<2x588xf32, #tpu.memory_space<vmem>>, vector<1x196xf32>,
    %c1 = arith.constant 1 : index
    %c0_18 = arith.constant 0 : index
    %c0_19 = arith.constant 0 : index
    %23 = vector.load %arg1[%c1, %c0_18, %c0_19] : memref<2x512x196xbf16, #tpu.memory_space<vmem>>, vector<1x512x196xbf16>
    %24 = vector.shape_cast %23 : vector<1x512x196xbf16> to vector<512x196xbf16>
    %cst_20 = arith.constant dense<0.000000e+00> : vector<36x196xf32>
    %25 = tpu.matmul %0, %24, %cst_20 {dimension_numbers = #tpu.dot_dimension_numbers<[1], [0], [0], [1], [0, 0, 1, 1], [], []>} : vector<36x512xbf16>, vector<512x196xbf16>, vector<36x196xf32> -> vector<36x196xf32>
    %26 = vector.broadcast %1 : vector<36x1xf32> to vector<36x196xf32>
    %27 = arith.addf %25, %26 : vector<36x196xf32>
    %cst_21 = arith.constant 0.000000e+00 : f32
    %28 = vector.broadcast %cst_21 : f32 to vector<36x196xf32>
    %29 = arith.maximumf %27, %28 : vector<36x196xf32>
    %cst_22 = arith.constant dense<0.000000e+00> : vector<3x196xf32>
    %30 = tpu.matmul %2, %29, %cst_22 {dimension_numbers = #tpu.dot_dimension_numbers<[1], [0], [0], [1], [0, 0, 1, 1], [], []>} : vector<3x36xf32>, vector<36x196xf32>, vector<3x196xf32> -> vector<3x196xf32>
    %c1_23 = arith.constant 1 : index
    %c0_24 = arith.constant 0 : index
    %c0_25 = arith.constant 0 : index
    %31 = vector.load %arg2[%c1_23, %c0_24, %c0_25] : memref<2x3x1xf32, #tpu.memory_space<vmem>>, vector<1x3x1xf32>
    %32 = vector.shape_cast %31 : vector<1x3x1xf32> to vector<3x1xf32>
    %33 = vector.broadcast %32 : vector<3x1xf32> to vector<3x196xf32>
    %34 = arith.addf %30, %33 : vector<3x196xf32>
    %cst_26 = arith.constant 0.000000e+00 : f32
    %35 = vector.broadcast %cst_26 : f32 to vector<3x196xf32>
    %36 = arith.maximumf %34, %35 : vector<3x196xf32>
    %37 = vector.extract_strided_slice %36 {offsets = [0, 0], sizes = [1, 196], strides = [1, 1]} : vector<3x196xf32> to vector<1x196xf32>
    %c1_27 = arith.constant 1 : index
    %c0_28 = arith.constant 0 : index
    %38 = vector.load %arg11[%c1_27, %c0_28] : memref<2x588xf32, #tpu.memory_space<vmem>>, vector<1x196xf32>
    tpu.vector_store %arg11[%c1_27, %c0_28], %37 {strides = array<i32>} : memref<2x588xf32, #tpu.memory_space<vmem>>, vector<1x196xf32>,
    %39 = vector.extract_strided_slice %36 {offsets = [1, 0], sizes = [1, 196], strides = [1, 1]} : vector<3x196xf32> to vector<1x196xf32>
    %c1_29 = arith.constant 1 : index
    %c196_30 = arith.constant 196 : index
    %40 = vector.load %arg11[%c1_29, %c196_30] : memref<2x588xf32, #tpu.memory_space<vmem>>, vector<1x196xf32>
    tpu.vector_store %arg11[%c1_29, %c196_30], %39 {strides = array<i32>} : memref<2x588xf32, #tpu.memory_space<vmem>>, vector<1x196xf32>,
    %41 = vector.extract_strided_slice %36 {offsets = [2, 0], sizes = [1, 196], strides = [1, 1]} : vector<3x196xf32> to vector<1x196xf32>
    %c1_31 = arith.constant 1 : index
    %c392_32 = arith.constant 392 : index
    %42 = vector.load %arg11[%c1_31, %c392_32] : memref<2x588xf32, #tpu.memory_space<vmem>>, vector<1x196xf32>
    tpu.vector_store %arg11[%c1_31, %c392_32], %41 {strides = array<i32>} : memref<2x588xf32, #tpu.memory_space<vmem>>, vector<1x196xf32>,
    %c0_33 = arith.constant 0 : index
    %c0_34 = arith.constant 0 : index
    %43 = vector.load %arg11[%c0_33, %c0_34] : memref<2x588xf32, #tpu.memory_space<vmem>>, vector<2x588xf32>
    %c0_35 = arith.constant 0 : index
    %c0_36 = arith.constant 0 : index
    %44 = vector.load %arg6[%c0_35, %c0_36] : memref<588x72xf32, #tpu.memory_space<vmem>>, vector<588x72xf32>
    %cst_37 = arith.constant dense<0.000000e+00> : vector<2x72xf32>
    %45 = tpu.matmul %43, %44, %cst_37 {dimension_numbers = #tpu.dot_dimension_numbers<[1], [0], [0], [1], [0, 0, 1, 1], [], []>} : vector<2x588xf32>, vector<588x72xf32>, vector<2x72xf32> -> vector<2x72xf32>
    %c0_38 = arith.constant 0 : index
    %c0_39 = arith.constant 0 : index
    %46 = vector.load %arg7[%c0_38, %c0_39] : memref<1x72xf32, #tpu.memory_space<vmem>>, vector<1x72xf32>
    %47 = vector.broadcast %46 : vector<1x72xf32> to vector<2x72xf32>
    %48 = arith.addf %45, %47 : vector<2x72xf32>
    %cst_40 = arith.constant 0.000000e+00 : f32
    %49 = vector.broadcast %cst_40 : f32 to vector<2x72xf32>
    %50 = arith.maximumf %48, %49 : vector<2x72xf32>
    %c0_41 = arith.constant 0 : index
    %c0_42 = arith.constant 0 : index
    %51 = vector.load %arg8[%c0_41, %c0_42] : memref<72x36xf32, #tpu.memory_space<vmem>>, vector<72x36xf32>
    %cst_43 = arith.constant dense<0.000000e+00> : vector<2x36xf32>
    %52 = tpu.matmul %50, %51, %cst_43 {dimension_numbers = #tpu.dot_dimension_numbers<[1], [0], [0], [1], [0, 0, 1, 1], [], []>} : vector<2x72xf32>, vector<72x36xf32>, vector<2x36xf32> -> vector<2x36xf32>
    %c0_44 = arith.constant 0 : index
    %c0_45 = arith.constant 0 : index
    %53 = vector.load %arg9[%c0_44, %c0_45] : memref<1x36xf32, #tpu.memory_space<vmem>>, vector<1x36xf32>
    %54 = vector.broadcast %53 : vector<1x36xf32> to vector<2x36xf32>
    %55 = arith.addf %52, %54 : vector<2x36xf32>
    %c0_46 = arith.constant 0 : index
    %c0_47 = arith.constant 0 : index
    %56 = vector.load %arg10[%c0_46, %c0_47] : memref<2x36xf32, #tpu.memory_space<vmem>>, vector<2x36xf32>
    tpu.vector_store %arg10[%c0_46, %c0_47], %55 {strides = array<i32>} : memref<2x36xf32, #tpu.memory_space<vmem>>, vector<2x36xf32>,
    return
  }
  func.func @transform_0(%arg0: i32) -> (i32, i32, i32) {
    %c0_i32 = arith.constant 0 : i32
    %c0_i32_0 = arith.constant 0 : i32
    %c0_i32_1 = arith.constant 0 : i32
    return %arg0, %c0_i32, %c0_i32_0 : i32, i32, i32
  }
  func.func @transform_1(%arg0: i32) -> (i32, i32, i32) {
    %c0_i32 = arith.constant 0 : i32
    %c0_i32_0 = arith.constant 0 : i32
    %c0_i32_1 = arith.constant 0 : i32
    return %arg0, %c0_i32, %c0_i32_0 : i32, i32, i32
  }
  func.func @transform_2(%arg0: i32) -> (i32, i32) {
    %c0_i32 = arith.constant 0 : i32
    %c0_i32_0 = arith.constant 0 : i32
    %c0_i32_1 = arith.constant 0 : i32
    return %c0_i32, %c0_i32_0 : i32, i32
  }
  func.func @transform_3(%arg0: i32) -> (i32, i32) {
    %c0_i32 = arith.constant 0 : i32
    %c0_i32_0 = arith.constant 0 : i32
    %c0_i32_1 = arith.constant 0 : i32
    return %c0_i32, %c0_i32_0 : i32, i32
  }
  func.func @transform_4(%arg0: i32) -> (i32, i32) {
    %c0_i32 = arith.constant 0 : i32
    %c0_i32_0 = arith.constant 0 : i32
    %c0_i32_1 = arith.constant 0 : i32
    return %c0_i32, %c0_i32_0 : i32, i32
  }
  func.func @transform_5(%arg0: i32) -> (i32, i32) {
    %c0_i32 = arith.constant 0 : i32
    %c0_i32_0 = arith.constant 0 : i32
    %c0_i32_1 = arith.constant 0 : i32
    return %c0_i32, %c0_i32_0 : i32, i32
  }
  func.func @transform_6(%arg0: i32) -> (i32, i32) {
    %c0_i32 = arith.constant 0 : i32
    %c0_i32_0 = arith.constant 0 : i32
    %c0_i32_1 = arith.constant 0 : i32
    return %c0_i32, %c0_i32_0 : i32, i32
  }
  func.func @transform_7(%arg0: i32) -> (i32, i32) {
    %c0_i32 = arith.constant 0 : i32
    %c0_i32_0 = arith.constant 0 : i32
    %c0_i32_1 = arith.constant 0 : i32
    return %c0_i32, %c0_i32_0 : i32, i32
  }
  func.func @transform_8(%arg0: i32) -> (i32, i32) {
    %c0_i32 = arith.constant 0 : i32
    %c0_i32_0 = arith.constant 0 : i32
    %c0_i32_1 = arith.constant 0 : i32
    return %c0_i32, %c0_i32_0 : i32, i32
  }
  func.func @transform_9(%arg0: i32) -> (i32, i32) {
    %c0_i32 = arith.constant 0 : i32
    %c0_i32_0 = arith.constant 0 : i32
    return %arg0, %c0_i32 : i32, i32
  }
}

</mosaic_0001>

<llo_original>
// kernel: tpu_custom_call.1
$region0: #{tpu_custom_call.1}
  #allocation0 [shape = 'u32[]', space=smem, size = 0x4, offset = 0x4, fixed_abs, tag = 'smem constant byte address 0x4 - core index']
  #allocation1 [shape = 'u32[144,128]{1,0:T(1,128)}', space=vmem, size = 0x12000, scoped, tag = 'internal scratch']
  #allocation2 [shape = 'f32[2,588]{1,0:T(2,128)}', space=vmem, size = 0x1400, scoped, tag = 'scratch operand']
  %s0 = inlined_call_operand.vmem [shape: bf16[2,512,196], index: 0, kind: input, shape index: {}]
  %s1 = inlined_call_operand.vmem [shape: f32[2,3,1], index: 1, kind: input, shape index: {}]
  %s2 = inlined_call_operand.vmem [shape: bf16[36,512], index: 2, kind: input, shape index: {}]
  %s3 = inlined_call_operand.vmem [shape: f32[36,1], index: 3, kind: input, shape index: {}]
  %s4 = inlined_call_operand.vmem [shape: f32[3,36], index: 4, kind: input, shape index: {}]
  %s5 = inlined_call_operand.vmem [shape: f32[588,72], index: 5, kind: input, shape index: {}]
  %s6 = inlined_call_operand.vmem [shape: f32[1,72], index: 6, kind: input, shape index: {}]
  %s7 = inlined_call_operand.vmem [shape: f32[72,36], index: 7, kind: input, shape index: {}]
  %s8 = inlined_call_operand.vmem [shape: f32[1,36], index: 8, kind: input, shape index: {}]
  %s9 = inlined_call_operand.hbm [shape: f32[2,36], index: 9, kind: output, shape index: {}]
  %s10 = sld [smem:[#allocation0]]
  $region46: #{tpu_custom_call.1} parent=0
    _
  %s12 = ssub.s32 1, %s10
  %s13 = scalar_select 0, %s12, %s10
  $region1: #{tpu_custom_call.1} parent=0
    #allocation3 [shape = 'u8[1024]{0}', space=vmem, size = 0x400, scoped, tag = 'output window, operand 0, single buffered']
    #allocation4 [shape = 's32[1]{0}', space=sflag, size = 0x4, scoped, tag = 'scoped memory for tpu_custom_call.1']
    %14 = vsyncpa [#allocation4], 0
    // Predicated region
    $region2: #{tpu_custom_call.1} parent=1 // pred_check
      _
    $region3: #{tpu_custom_call.1} parent=1 // pred_check_branch
      %16 = sbr.rel (0) target = $region5
    $region4: #{tpu_custom_call.1} parent=1 // pred_region
      _
    $region5: #{tpu_custom_call.1} parent=1 // pred_fallthru
      _
    // Predicated region
    $region6: #{tpu_custom_call.1} parent=1 // pred_check
      _
    $region7: #{tpu_custom_call.1} parent=1 // pred_check_branch
      %18 = sbr.rel (0) target = $region9
    $region8: #{tpu_custom_call.1} parent=1 // pred_region
      _
    $region9: #{tpu_custom_call.1} parent=1 // pred_fallthru
      _
    // Predicated region
    $region10: #{tpu_custom_call.1} parent=1 // pred_check
      _
    $region11: #{tpu_custom_call.1} parent=1 // pred_check_branch
      %20 = sbr.rel (0) target = $region13
    $region12: #{tpu_custom_call.1} parent=1 // pred_region
      _
    $region13: #{tpu_custom_call.1} parent=1 // pred_fallthru
      _
    // Predicated region
    $region14: #{tpu_custom_call.1} parent=1 // pred_check
      _
    $region15: #{tpu_custom_call.1} parent=1 // pred_check_branch
      %22 = sbr.rel (0) target = $region17
    $region16: #{tpu_custom_call.1} parent=1 // pred_region
      _
    $region17: #{tpu_custom_call.1} parent=1 // pred_fallthru
      _
    // Predicated region
    $region18: #{tpu_custom_call.1} parent=1 // pred_check
      _
    $region19: #{tpu_custom_call.1} parent=1 // pred_check_branch
      %24 = sbr.rel (0) target = $region21
    $region20: #{tpu_custom_call.1} parent=1 // pred_region
      _
    $region21: #{tpu_custom_call.1} parent=1 // pred_fallthru
      _
    // Predicated region
    $region22: #{tpu_custom_call.1} parent=1 // pred_check
      _
    $region23: #{tpu_custom_call.1} parent=1 // pred_check_branch
      %26 = sbr.rel (0) target = $region25
    $region24: #{tpu_custom_call.1} parent=1 // pred_region
      _
    $region25: #{tpu_custom_call.1} parent=1 // pred_fallthru
      _
    // Predicated region
    $region26: #{tpu_custom_call.1} parent=1 // pred_check
      _
    $region27: #{tpu_custom_call.1} parent=1 // pred_check_branch
      %28 = sbr.rel (0) target = $region29
    $region28: #{tpu_custom_call.1} parent=1 // pred_region
      _
    $region29: #{tpu_custom_call.1} parent=1 // pred_fallthru
      _
    // Predicated region
    $region30: #{tpu_custom_call.1} parent=1 // pred_check
      _
    $region31: #{tpu_custom_call.1} parent=1 // pred_check_branch
      %30 = sbr.rel (0) target = $region33
    $region32: #{tpu_custom_call.1} parent=1 // pred_region
      _
    $region33: #{tpu_custom_call.1} parent=1 // pred_fallthru
      _
    // Predicated region
    $region34: #{tpu_custom_call.1} parent=1 // pred_check
      _
    $region35: #{tpu_custom_call.1} parent=1 // pred_check_branch
      %32 = sbr.rel (0) target = $region37
    $region36: #{tpu_custom_call.1} parent=1 // pred_region
      _
    $region37: #{tpu_custom_call.1} parent=1 // pred_fallthru
      _
    %v33 = vld [vmem:[%s2] sm:$0xff]
    %v34 = vld [vmem:[%s2 + $0x8] sm:$0xff]
    %v35 = vld [vmem:[%s2 + $0x10] sm:$0xff]
    %v36 = vld [vmem:[%s2 + $0x18] sm:$0xff]
    %v37 = vld [vmem:[%s2 + $0x20] sm:$0xff]
    %v38 = vld [vmem:[%s2 + $0x28] sm:$0xff]
    %v39 = vld [vmem:[%s2 + $0x30] sm:$0xff]
    %v40 = vld [vmem:[%s2 + $0x38] sm:$0xff]
    %v41 = vld [vmem:[%s2 + $0x40] sm:$0x33]
    %v42 = vld [vmem:[%s2 + $0x48] sm:$0x33]
    %v43 = vld [vmem:[%s3] sm:$0xff]
    %v44 = vld [vmem:[%s3 + $0x8] sm:$0xff]
    %v45 = vld [vmem:[%s3 + $0x10] sm:$0xff]
    %v46 = vld [vmem:[%s3 + $0x18] sm:$0xff]
    %v47 = vld [vmem:[%s3 + $0x20] sm:$0xf]
    %v48 = vld [vmem:[%s4] sm:$0x7]
    %v49 = vld [vmem:[%s0] sm:$0xff]
    %v50 = vld [vmem:[%s0 + $0x8] sm:$0xff]
    %v51 = vld [vmem:[%s0 + $0x10] sm:$0xff]
    %v52 = vld [vmem:[%s0 + $0x18] sm:$0xff]
    %v53 = vld [vmem:[%s0 + $0x20] sm:$0xff]
    %v54 = vld [vmem:[%s0 + $0x28] sm:$0xff]
    %v55 = vld [vmem:[%s0 + $0x30] sm:$0xff]
    %v56 = vld [vmem:[%s0 + $0x38] sm:$0xff]
    %v57 = vld [vmem:[%s0 + $0x40] sm:$0xff]
    %v58 = vld [vmem:[%s0 + $0x48] sm:$0xff]
    %v59 = vld [vmem:[%s0 + $0x50] sm:$0xff]
    %v60 = vld [vmem:[%s0 + $0x58] sm:$0xff]
    %v61 = vld [vmem:[%s0 + $0x60] sm:$0xff]
    %v62 = vld [vmem:[%s0 + $0x68] sm:$0xff]
    %v63 = vld [vmem:[%s0 + $0x70] sm:$0xff]
    %v64 = vld [vmem:[%s0 + $0x78] sm:$0xff]
    %v65 = vld [vmem:[%s0 + $0x80] sm:$0xff]
    %v66 = vld [vmem:[%s0 + $0x88] sm:$0xff]
    %v67 = vld [vmem:[%s0 + $0x90] sm:$0xff]
    %v68 = vld [vmem:[%s0 + $0x98] sm:$0xff]
    %v69 = vld [vmem:[%s0 + $0xa0] sm:$0xff]
    %v70 = vld [vmem:[%s0 + $0xa8] sm:$0xff]
    %v71 = vld [vmem:[%s0 + $0xb0] sm:$0xff]
    %v72 = vld [vmem:[%s0 + $0xb8] sm:$0xff]
    %v73 = vld [vmem:[%s0 + $0xc0] sm:$0xff]
    %v74 = vld [vmem:[%s0 + $0xc8] sm:$0xff]
    %v75 = vld [vmem:[%s0 + $0xd0] sm:$0xff]
    %v76 = vld [vmem:[%s0 + $0xd8] sm:$0xff]
    %v77 = vld [vmem:[%s0 + $0xe0] sm:$0xff]
    %v78 = vld [vmem:[%s0 + $0xe8] sm:$0xff]
    %v79 = vld [vmem:[%s0 + $0xf0] sm:$0xff]
    %v80 = vld [vmem:[%s0 + $0xf8] sm:$0xff]
    %v81 = vld [vmem:[%s0 + $0x100] sm:$0xff]
    %v82 = vld [vmem:[%s0 + $0x108] sm:$0xff]
    %v83 = vld [vmem:[%s0 + $0x110] sm:$0xff]
    %v84 = vld [vmem:[%s0 + $0x118] sm:$0xff]
    %v85 = vld [vmem:[%s0 + $0x120] sm:$0xff]
    %v86 = vld [vmem:[%s0 + $0x128] sm:$0xff]
    %v87 = vld [vmem:[%s0 + $0x130] sm:$0xff]
    %v88 = vld [vmem:[%s0 + $0x138] sm:$0xff]
    %v89 = vld [vmem:[%s0 + $0x140] sm:$0xff]
    %v90 = vld [vmem:[%s0 + $0x148] sm:$0xff]
    %v91 = vld [vmem:[%s0 + $0x150] sm:$0xff]
    %v92 = vld [vmem:[%s0 + $0x158] sm:$0xff]
    %v93 = vld [vmem:[%s0 + $0x160] sm:$0xff]
    %v94 = vld [vmem:[%s0 + $0x168] sm:$0xff]
    %v95 = vld [vmem:[%s0 + $0x170] sm:$0xff]
    %v96 = vld [vmem:[%s0 + $0x178] sm:$0xff]
    %v97 = vld [vmem:[%s0 + $0x180] sm:$0xff]
    %v98 = vld [vmem:[%s0 + $0x188] sm:$0xff]
    %v99 = vld [vmem:[%s0 + $0x190] sm:$0xff]
    %v100 = vld [vmem:[%s0 + $0x198] sm:$0xff]
    %v101 = vld [vmem:[%s0 + $0x1a0] sm:$0xff]
    %v102 = vld [vmem:[%s0 + $0x1a8] sm:$0xff]
    %v103 = vld [vmem:[%s0 + $0x1b0] sm:$0xff]
    %v104 = vld [vmem:[%s0 + $0x1b8] sm:$0xff]
    %v105 = vld [vmem:[%s0 + $0x1c0] sm:$0xff]
    %v106 = vld [vmem:[%s0 + $0x1c8] sm:$0xff]
    %v107 = vld [vmem:[%s0 + $0x1d0] sm:$0xff]
    %v108 = vld [vmem:[%s0 + $0x1d8] sm:$0xff]
    %v109 = vld [vmem:[%s0 + $0x1e0] sm:$0xff]
    %v110 = vld [vmem:[%s0 + $0x1e8] sm:$0xff]
    %v111 = vld [vmem:[%s0 + $0x1f0] sm:$0xff]
    %v112 = vld [vmem:[%s0 + $0x1f8] sm:$0xff]
    %114 = vset.pattern.permute.xlu0 0
    %115 = vperm.xlu0 %114, %v43
    %v116 = vpop.permute.xlu0 %115
    %119 = vset.pattern.permute.xlu0 0
    %120 = vperm.xlu0 %119, %v44
    %v121 = vpop.permute.xlu0 %120
    %124 = vset.pattern.permute.xlu0 0
    %125 = vperm.xlu0 %124, %v45
    %v126 = vpop.permute.xlu0 %125
    %129 = vset.pattern.permute.xlu0 0
    %130 = vperm.xlu0 %129, %v46
    %v131 = vpop.permute.xlu0 %130
    %134 = vset.pattern.permute.xlu0 0
    %135 = vperm.xlu0 %134, %v47
    %v136 = vpop.permute.xlu0 %135
    %v148 = vunpack.c.l.b16 %v33
    %v149 = vunpack.c.h.b16 %v33
    %v150 = vunpack.c.l.b16 %v34
    %v151 = vunpack.c.h.b16 %v34
    %v152 = vunpack.c.l.b16 %v35
    %v153 = vunpack.c.h.b16 %v35
    %v154 = vunpack.c.l.b16 %v36
    %v155 = vunpack.c.h.b16 %v36
    %v156 = vunpack.c.l.b16 %v37
    %v157 = vunpack.c.h.b16 %v37
    %v158 = vunpack.c.l.b16 %v38
    %v159 = vunpack.c.h.b16 %v38
    %v160 = vunpack.c.l.b16 %v39
    %v161 = vunpack.c.h.b16 %v39
    %v162 = vunpack.c.l.b16 %v40
    %v163 = vunpack.c.h.b16 %v40
    %v164 = vunpack.c.l.b16 %v41
    %v165 = vunpack.c.h.b16 %v41
    %v166 = vunpack.c.l.b16 %v42
    %v167 = vunpack.c.h.b16 %v42
    %v168 = vpack.c.b16 %v152, %v148
    %v169 = vpack.c.b16 %v153, %v149
    %v170 = vpack.c.b16 %v154, %v150
    %v171 = vpack.c.b16 %v155, %v151
    %v172 = vpack.c.b16 %v160, %v156
    %v173 = vpack.c.b16 %v161, %v157
    %v174 = vpack.c.b16 %v162, %v158
    %v175 = vpack.c.b16 %v163, %v159
    %v176 = vpack.c.b16 %v164, %v164
    %v177 = vpack.c.b16 %v165, %v165
    %v178 = vpack.c.b16 %v166, %v166
    %v179 = vpack.c.b16 %v167, %v167
    %v256 = vunpack.c.l.b16 %v49
    %v257 = vunpack.c.h.b16 %v49
    %v258 = vunpack.c.l.b16 %v50
    %v259 = vunpack.c.h.b16 %v50
    %v260 = vunpack.c.l.b16 %v51
    %v261 = vunpack.c.h.b16 %v51
    %v262 = vunpack.c.l.b16 %v52
    %v263 = vunpack.c.h.b16 %v52
    %v264 = vunpack.c.l.b16 %v53
    %v265 = vunpack.c.h.b16 %v53
    %v266 = vunpack.c.l.b16 %v54
    %v267 = vunpack.c.h.b16 %v54
    %v268 = vunpack.c.l.b16 %v55
    %v269 = vunpack.c.h.b16 %v55
    %v270 = vunpack.c.l.b16 %v56
    %v271 = vunpack.c.h.b16 %v56
    %v272 = vunpack.c.l.b16 %v57
    %v273 = vunpack.c.h.b16 %v57
    %v274 = vunpack.c.l.b16 %v58
    %v275 = vunpack.c.h.b16 %v58
    %v276 = vunpack.c.l.b16 %v59
    %v277 = vunpack.c.h.b16 %v59
    %v278 = vunpack.c.l.b16 %v60
    %v279 = vunpack.c.h.b16 %v60
    %v280 = vunpack.c.l.b16 %v61
    %v281 = vunpack.c.h.b16 %v61
    %v282 = vunpack.c.l.b16 %v62
    %v283 = vunpack.c.h.b16 %v62
    %v284 = vunpack.c.l.b16 %v63
    %v285 = vunpack.c.h.b16 %v63
    %v286 = vunpack.c.l.b16 %v64
    %v287 = vunpack.c.h.b16 %v64
    %v288 = vunpack.c.l.b16 %v65
    %v289 = vunpack.c.h.b16 %v65
    %v290 = vunpack.c.l.b16 %v66
    %v291 = vunpack.c.h.b16 %v66
    %v292 = vunpack.c.l.b16 %v67
    %v293 = vunpack.c.h.b16 %v67
    %v294 = vunpack.c.l.b16 %v68
    %v295 = vunpack.c.h.b16 %v68
    %v296 = vunpack.c.l.b16 %v69
    %v297 = vunpack.c.h.b16 %v69
    %v298 = vunpack.c.l.b16 %v70
    %v299 = vunpack.c.h.b16 %v70
    %v300 = vunpack.c.l.b16 %v71
    %v301 = vunpack.c.h.b16 %v71
    %v302 = vunpack.c.l.b16 %v72
    %v303 = vunpack.c.h.b16 %v72
    %v304 = vunpack.c.l.b16 %v73
    %v305 = vunpack.c.h.b16 %v73
    %v306 = vunpack.c.l.b16 %v74
    %v307 = vunpack.c.h.b16 %v74
    %v308 = vunpack.c.l.b16 %v75
    %v309 = vunpack.c.h.b16 %v75
    %v310 = vunpack.c.l.b16 %v76
    %v311 = vunpack.c.h.b16 %v76
    %v312 = vunpack.c.l.b16 %v77
    %v313 = vunpack.c.h.b16 %v77
    %v314 = vunpack.c.l.b16 %v78
    %v315 = vunpack.c.h.b16 %v78
    %v316 = vunpack.c.l.b16 %v79
    %v317 = vunpack.c.h.b16 %v79
    %v318 = vunpack.c.l.b16 %v80
    %v319 = vunpack.c.h.b16 %v80
    %v320 = vunpack.c.l.b16 %v81
    %v321 = vunpack.c.h.b16 %v81
    %v322 = vunpack.c.l.b16 %v82
    %v323 = vunpack.c.h.b16 %v82
    %v324 = vunpack.c.l.b16 %v83
    %v325 = vunpack.c.h.b16 %v83
    %v326 = vunpack.c.l.b16 %v84
    %v327 = vunpack.c.h.b16 %v84
    %v328 = vunpack.c.l.b16 %v85
    %v329 = vunpack.c.h.b16 %v85
    %v330 = vunpack.c.l.b16 %v86
    %v331 = vunpack.c.h.b16 %v86
    %v332 = vunpack.c.l.b16 %v87
    %v333 = vunpack.c.h.b16 %v87
    %v334 = vunpack.c.l.b16 %v88
    %v335 = vunpack.c.h.b16 %v88
    %v336 = vunpack.c.l.b16 %v89
    %v337 = vunpack.c.h.b16 %v89
    %v338 = vunpack.c.l.b16 %v90
    %v339 = vunpack.c.h.b16 %v90
    %v340 = vunpack.c.l.b16 %v91
    %v341 = vunpack.c.h.b16 %v91
    %v342 = vunpack.c.l.b16 %v92
    %v343 = vunpack.c.h.b16 %v92
    %v344 = vunpack.c.l.b16 %v93
    %v345 = vunpack.c.h.b16 %v93
    %v346 = vunpack.c.l.b16 %v94
    %v347 = vunpack.c.h.b16 %v94
    %v348 = vunpack.c.l.b16 %v95
    %v349 = vunpack.c.h.b16 %v95
    %v350 = vunpack.c.l.b16 %v96
    %v351 = vunpack.c.h.b16 %v96
    %v352 = vunpack.c.l.b16 %v97
    %v353 = vunpack.c.h.b16 %v97
    %v354 = vunpack.c.l.b16 %v98
    %v355 = vunpack.c.h.b16 %v98
    %v356 = vunpack.c.l.b16 %v99
    %v357 = vunpack.c.h.b16 %v99
    %v358 = vunpack.c.l.b16 %v100
    %v359 = vunpack.c.h.b16 %v100
    %v360 = vunpack.c.l.b16 %v101
    %v361 = vunpack.c.h.b16 %v101
    %v362 = vunpack.c.l.b16 %v102
    %v363 = vunpack.c.h.b16 %v102
    %v364 = vunpack.c.l.b16 %v103
    %v365 = vunpack.c.h.b16 %v103
    %v366 = vunpack.c.l.b16 %v104
    %v367 = vunpack.c.h.b16 %v104
    %v368 = vunpack.c.l.b16 %v105
    %v369 = vunpack.c.h.b16 %v105
    %v370 = vunpack.c.l.b16 %v106
    %v371 = vunpack.c.h.b16 %v106
    %v372 = vunpack.c.l.b16 %v107
    %v373 = vunpack.c.h.b16 %v107
    %v374 = vunpack.c.l.b16 %v108
    %v375 = vunpack.c.h.b16 %v108
    %v376 = vunpack.c.l.b16 %v109
    %v377 = vunpack.c.h.b16 %v109
    %v378 = vunpack.c.l.b16 %v110
    %v379 = vunpack.c.h.b16 %v110
    %v380 = vunpack.c.l.b16 %v111
    %v381 = vunpack.c.h.b16 %v111
    %v382 = vunpack.c.l.b16 %v112
    %v383 = vunpack.c.h.b16 %v112
    %v384 = vpack.c.b16 %v258, %v256
    %v385 = vpack.c.b16 %v259, %v257
    %v386 = vpack.c.b16 %v262, %v260
    %v387 = vpack.c.b16 %v263, %v261
    %v388 = vpack.c.b16 %v266, %v264
    %v389 = vpack.c.b16 %v267, %v265
    %v390 = vpack.c.b16 %v270, %v268
    %v391 = vpack.c.b16 %v271, %v269
    %v392 = vpack.c.b16 %v274, %v272
    %v393 = vpack.c.b16 %v275, %v273
    %v394 = vpack.c.b16 %v278, %v276
    %v395 = vpack.c.b16 %v279, %v277
    %v396 = vpack.c.b16 %v282, %v280
    %v397 = vpack.c.b16 %v283, %v281
    %v398 = vpack.c.b16 %v286, %v284
    %v399 = vpack.c.b16 %v287, %v285
    %v400 = vpack.c.b16 %v290, %v288
    %v401 = vpack.c.b16 %v291, %v289
    %v402 = vpack.c.b16 %v294, %v292
    %v403 = vpack.c.b16 %v295, %v293
    %v404 = vpack.c.b16 %v298, %v296
    %v405 = vpack.c.b16 %v299, %v297
    %v406 = vpack.c.b16 %v302, %v300
    %v407 = vpack.c.b16 %v303, %v301
    %v408 = vpack.c.b16 %v306, %v304
    %v409 = vpack.c.b16 %v307, %v305
    %v410 = vpack.c.b16 %v310, %v308
    %v411 = vpack.c.b16 %v311, %v309
    %v412 = vpack.c.b16 %v314, %v312
    %v413 = vpack.c.b16 %v315, %v313
    %v414 = vpack.c.b16 %v318, %v316
    %v415 = vpack.c.b16 %v319, %v317
    %v416 = vpack.c.b16 %v322, %v320
    %v417 = vpack.c.b16 %v323, %v321
    %v418 = vpack.c.b16 %v326, %v324
    %v419 = vpack.c.b16 %v327, %v325
    %v420 = vpack.c.b16 %v330, %v328
    %v421 = vpack.c.b16 %v331, %v329
    %v422 = vpack.c.b16 %v334, %v332
    %v423 = vpack.c.b16 %v335, %v333
    %v424 = vpack.c.b16 %v338, %v336
    %v425 = vpack.c.b16 %v339, %v337
    %v426 = vpack.c.b16 %v342, %v340
    %v427 = vpack.c.b16 %v343, %v341
    %v428 = vpack.c.b16 %v346, %v344
    %v429 = vpack.c.b16 %v347, %v345
    %v430 = vpack.c.b16 %v350, %v348
    %v431 = vpack.c.b16 %v351, %v349
    %v432 = vpack.c.b16 %v354, %v352
    %v433 = vpack.c.b16 %v355, %v353
    %v434 = vpack.c.b16 %v358, %v356
    %v435 = vpack.c.b16 %v359, %v357
    %v436 = vpack.c.b16 %v362, %v360
    %v437 = vpack.c.b16 %v363, %v361
    %v438 = vpack.c.b16 %v366, %v364
    %v439 = vpack.c.b16 %v367, %v365
    %v440 = vpack.c.b16 %v370, %v368
    %v441 = vpack.c.b16 %v371, %v369
    %v442 = vpack.c.b16 %v374, %v372
    %v443 = vpack.c.b16 %v375, %v373
    %v444 = vpack.c.b16 %v378, %v376
    %v445 = vpack.c.b16 %v379, %v377
    %v446 = vpack.c.b16 %v382, %v380
    %v447 = vpack.c.b16 %v383, %v381
    %512 = vmatprep.subr.bf16.mxu0 %v385
    %513 = vmatpush1.bf16.msra.mxu0 %v384
    %514 = vmatprep.subr.bf16.mxu0 %v387
    %515 = vmatpush1.bf16.msra.mxu0 %v386
    %516 = vmatprep.subr.bf16.mxu0 %v389
    %517 = vmatpush1.bf16.msra.mxu0 %v388
    %518 = vmatprep.subr.bf16.mxu0 %v391
    %519 = vmatpush1.bf16.msra.mxu0 %v390
    %520 = vmatprep.subr.bf16.mxu0 %v393
    %521 = vmatpush1.bf16.msra.mxu0 %v392
    %522 = vmatprep.subr.bf16.mxu0 %v395
    %523 = vmatpush1.bf16.msra.mxu0 %v394
    %524 = vmatprep.subr.bf16.mxu0 %v397
    %525 = vmatpush1.bf16.msra.mxu0 %v396
    %526 = vmatprep.subr.bf16.mxu0 %v399
    %527 = vmatpush1.bf16.msra.mxu0 %v398
    %528 = vmatprep.subr.bf16.mxu0 %v401
    %529 = vmatpush1.bf16.msra.mxu0 %v400
    %530 = vmatprep.subr.bf16.mxu0 %v403
    %531 = vmatpush1.bf16.msra.mxu0 %v402
    %532 = vmatprep.subr.bf16.mxu0 %v405
    %533 = vmatpush1.bf16.msra.mxu0 %v404
    %534 = vmatprep.subr.bf16.mxu0 %v407
    %535 = vmatpush1.bf16.msra.mxu0 %v406
    %536 = vmatprep.subr.bf16.mxu0 %v409
    %537 = vmatpush1.bf16.msra.mxu0 %v408
    %538 = vmatprep.subr.bf16.mxu0 %v411
    %539 = vmatpush1.bf16.msra.mxu0 %v410
    %540 = vmatprep.subr.bf16.mxu0 %v413
    %541 = vmatpush1.bf16.msra.mxu0 %v412
    %542 = vmatprep.subr.bf16.mxu0 %v415
    %543 = vmatpush1.bf16.msra.mxu0 %v414
    %544 = vmatprep.mubr.bf16.mxu0 %v169
    %545 = vmatmul.mubr.bf16.gmra.mrb[0].mxu0 %v168
    %v546 = vpop.f32.mrb[0].mxu0
    %v547 = vadd.f32 %v116, %v546
    %v548 = vpop.f32.mrb[0].mxu0
    %v549 = vadd.f32 %v116, %v548
    %v550 = vpop.f32.mrb[0].mxu0
    %v551 = vadd.f32 %v121, %v550
    %v552 = vpop.f32.mrb[0].mxu0
    %v553 = vadd.f32 %v121, %v552
    %554 = vmatprep.mubr.bf16.mxu0 %v173
    %555 = vmatmul.mubr.bf16.gmra.mrb[0].mxu0 %v172
    %v556 = vpop.f32.mrb[0].mxu0
    %v557 = vadd.f32 %v126, %v556
    %v558 = vpop.f32.mrb[0].mxu0
    %v559 = vadd.f32 %v126, %v558
    %v560 = vpop.f32.mrb[0].mxu0
    %v561 = vadd.f32 %v131, %v560
    %v562 = vpop.f32.mrb[0].mxu0
    %v563 = vadd.f32 %v131, %v562
    %564 = vmatprep.mubr.bf16.mxu0 %v177
    %565 = vmatmul.mubr.bf16.gmra.mrb[0].mxu0 %v176
    %v566 = vpop.f32.mrb[0].mxu0
    %v567 = vadd.f32 %v136, %v566
    %v568 = vpop.f32.mrb[0].mxu0
    %v569 = vadd.f32 %v136, %v568
    %v570 = vpop.f32.mrb[0].mxu0
    %v571 = vpop.f32.mrb[0].mxu0
    %572 = vdwg.mxu0
    %573 = vmatprep.subr.bf16.mxu0 %v417
    %574 = vmatpush1.bf16.msra.mxu0 %v416
    %575 = vmatprep.subr.bf16.mxu0 %v419
    %576 = vmatpush1.bf16.msra.mxu0 %v418
    %577 = vmatprep.subr.bf16.mxu0 %v421
    %578 = vmatpush1.bf16.msra.mxu0 %v420
    %579 = vmatprep.subr.bf16.mxu0 %v423
    %580 = vmatpush1.bf16.msra.mxu0 %v422
    %581 = vmatprep.subr.bf16.mxu0 %v425
    %582 = vmatpush1.bf16.msra.mxu0 %v424
    %583 = vmatprep.subr.bf16.mxu0 %v427
    %584 = vmatpush1.bf16.msra.mxu0 %v426
    %585 = vmatprep.subr.bf16.mxu0 %v429
    %586 = vmatpush1.bf16.msra.mxu0 %v428
    %587 = vmatprep.subr.bf16.mxu0 %v431
    %588 = vmatpush1.bf16.msra.mxu0 %v430
    %589 = vmatprep.subr.bf16.mxu0 %v433
    %590 = vmatpush1.bf16.msra.mxu0 %v432
    %591 = vmatprep.subr.bf16.mxu0 %v435
    %592 = vmatpush1.bf16.msra.mxu0 %v434
    %593 = vmatprep.subr.bf16.mxu0 %v437
    %594 = vmatpush1.bf16.msra.mxu0 %v436
    %595 = vmatprep.subr.bf16.mxu0 %v439
    %596 = vmatpush1.bf16.msra.mxu0 %v438
    %597 = vmatprep.subr.bf16.mxu0 %v441
    %598 = vmatpush1.bf16.msra.mxu0 %v440
    %599 = vmatprep.subr.bf16.mxu0 %v443
    %600 = vmatpush1.bf16.msra.mxu0 %v442
    %601 = vmatprep.subr.bf16.mxu0 %v445
    %602 = vmatpush1.bf16.msra.mxu0 %v444
    %603 = vmatprep.subr.bf16.mxu0 %v447
    %604 = vmatpush1.bf16.msra.mxu0 %v446
    %605 = vmatprep.mubr.bf16.mxu0 %v171
    %606 = vmatmul.mubr.bf16.gmra.mrb[0].mxu0 %v170
    %v607 = vpop.f32.mrb[0].mxu0
    %v608 = vadd.f32 %v547, %v607
    %v609 = vpop.f32.mrb[0].mxu0
    %v610 = vadd.f32 %v549, %v609
    %v611 = vpop.f32.mrb[0].mxu0
    %v612 = vadd.f32 %v551, %v611
    %v613 = vpop.f32.mrb[0].mxu0
    %v614 = vadd.f32 %v553, %v613
    %615 = vmatprep.mubr.bf16.mxu0 %v175
    %616 = vmatmul.mubr.bf16.gmra.mrb[0].mxu0 %v174
    %v617 = vpop.f32.mrb[0].mxu0
    %v618 = vadd.f32 %v557, %v617
    %v619 = vpop.f32.mrb[0].mxu0
    %v620 = vadd.f32 %v559, %v619
    %v621 = vpop.f32.mrb[0].mxu0
    %v622 = vadd.f32 %v561, %v621
    %v623 = vpop.f32.mrb[0].mxu0
    %v624 = vadd.f32 %v563, %v623
    %625 = vmatprep.mubr.bf16.mxu0 %v179
    %626 = vmatmul.mubr.bf16.gmra.mrb[0].mxu0 %v178
    %v627 = vpop.f32.mrb[0].mxu0
    %v628 = vadd.f32 %v567, %v627
    %v629 = vpop.f32.mrb[0].mxu0
    %v630 = vadd.f32 %v569, %v629
    %v631 = vpop.f32.mrb[0].mxu0
    %v632 = vpop.f32.mrb[0].mxu0
    %633 = vdwg.mxu0
    %v634 = vmax.f32 %v608, 0.0
    %v635 = vmax.f32 %v610, 0.0
    %v636 = vmax.f32 %v612, 0.0
    %v637 = vmax.f32 %v614, 0.0
    %v638 = vmax.f32 %v618, 0.0
    %v639 = vmax.f32 %v620, 0.0
    %v640 = vmax.f32 %v622, 0.0
    %v641 = vmax.f32 %v624, 0.0
    %v642 = vmax.f32 %v628, 0.0
    %v643 = vmax.f32 %v630, 0.0
    %v644 = vld [vmem:[%s1] sm:$0x7]
    %646 = vset.pattern.permute.xlu0 0
    %647 = vperm.xlu0 %646, %v644
    %v648 = vpop.permute.xlu0 %647
    %vm650 = vcmask 293888
    %v652 = vsel %vm650, %v48, 0
    %vm654 = vcmask 1043456
    %v656 = vsel %vm654, %v642, 0
    %v659 = vsel %vm654, %v643, 0
    %661 = vmatprep.subr.mxu0 %v635
    %662 = vmatpush1.msra.mxu0 %v634
    %663 = vmatprep.subr.mxu0 %v637
    %664 = vmatpush1.msra.mxu0 %v636
    %665 = vmatprep.subr.mxu0 %v639
    %666 = vmatpush1.msra.mxu0 %v638
    %667 = vmatprep.subr.mxu0 %v641
    %668 = vmatpush1.msra.mxu0 %v640
    %669 = vmatprep.subr.mxu0 %v659
    %670 = vmatpush1.msra.mxu0 %v656
    %671 = vmatprep.subr.mxu0 0.0
    %672 = vmatpush1.msra.mxu0 0.0
    %673 = vmatprep.subr.mxu0 0.0
    %674 = vmatpush1.msra.mxu0 0.0
    %675 = vmatprep.subr.mxu0 0.0
    %676 = vmatpush1.msra.mxu0 0.0
    %677 = vmatprep.subr.mxu0 0.0
    %678 = vmatpush1.msra.mxu0 0.0
    %679 = vmatprep.subr.mxu0 0.0
    %680 = vmatpush1.msra.mxu0 0.0
    %681 = vmatprep.subr.mxu0 0.0
    %682 = vmatpush1.msra.mxu0 0.0
    %683 = vmatprep.subr.mxu0 0.0
    %684 = vmatpush1.msra.mxu0 0.0
    %685 = vmatprep.subr.mxu0 0.0
    %686 = vmatpush1.msra.mxu0 0.0
    %687 = vmatprep.subr.mxu0 0.0
    %688 = vmatpush1.msra.mxu0 0.0
    %689 = vmatprep.subr.mxu0 0.0
    %690 = vmatpush1.msra.mxu0 0.0
    %691 = vmatprep.subr.mxu0 0.0
    %692 = vmatpush1.msra.mxu0 0.0
    %693 = vmatprep.subr.mxu0 0.0
    %694 = vmatpush1.msra.mxu0 0.0
    %695 = vmatprep.subr.mxu0 0.0
    %696 = vmatpush1.msra.mxu0 0.0
    %697 = vmatprep.subr.mxu0 0.0
    %698 = vmatpush1.msra.mxu0 0.0
    %699 = vmatprep.subr.mxu0 0.0
    %700 = vmatpush1.msra.mxu0 0.0
    %701 = vmatprep.subr.mxu0 0.0
    %702 = vmatpush1.msra.mxu0 0.0
    %703 = vmatprep.subr.mxu0 0.0
    %704 = vmatpush1.msra.mxu0 0.0
    %705 = vmatprep.subr.mxu0 0.0
    %706 = vmatpush1.msra.mxu0 0.0
    %707 = vmatprep.subr.mxu0 0.0
    %708 = vmatpush1.msra.mxu0 0.0
    %709 = vmatprep.subr.mxu0 0.0
    %710 = vmatpush1.msra.mxu0 0.0
    %711 = vmatprep.subr.mxu0 0.0
    %712 = vmatpush1.msra.mxu0 0.0
    %713 = vmatprep.subr.mxu0 0.0
    %714 = vmatpush1.msra.mxu0 0.0
    %715 = vmatprep.subr.mxu0 0.0
    %716 = vmatpush1.msra.mxu0 0.0
    %717 = vmatprep.subr.mxu0 0.0
    %718 = vmatpush1.msra.mxu0 0.0
    %719 = vmatprep.subr.mxu0 0.0
    %720 = vmatpush1.msra.mxu0 0.0
    %721 = vmatprep.subr.mxu0 0.0
    %722 = vmatpush1.msra.mxu0 0.0
    %723 = vmatprep.subr.mxu0 0.0
    %724 = vmatpush1.msra.mxu0 0.0
    %725 = vmatprep.mubr.f32.mxu0 0.0
    %726 = vmatmul.mubr.f32.gmra.mrb[0].mxu0 %v652
    %v727 = vpop.f32.mrb[0].mxu0
    %v728 = vadd.f32 %v648, %v727
    %v729 = vpop.f32.mrb[0].mxu0
    %v730 = vadd.f32 %v648, %v729
    %731 = vdwg.mxu0
    %v732 = vmax.f32 %v728, 0.0
    %v733 = vmax.f32 %v730, 0.0
    %v736 = vcombine.low %v732, %v733
    %v738 = vunpack.c.l.s4 1966171168
    %v739 = vunpack.c.0.s8 %v738
    %v740 = vlaneseq
    %v741 = vshrl.u32 %v740, 7
    %v742 = vsub.s32 %v739, %v741
    %v743 = vrot.slane %v736, %v742
    %v745 = vunpack.c.l.s4 1966171168
    %v746 = vunpack.c.0.s8 %v745
    %v747 = vlaneseq
    %v748 = vshrl.u32 %v747, 7
    %v749 = vsub.s32 %v746, %v748
    %v750 = vrot.slane %v743, %v749
    %v752 = vlaneseq
    %vm753 = vcmp.ge.s32.totalorder %v752, 0
    %vm754 = vcmp.lt.s32.totalorder %v752, 196
    %vm755 = vmand %vm753, %vm754
    %756 = vst.msk [vmem:[#allocation2] ss:$2 sm:$0x3] %vm755, %v750
    %v757 = vcombine.high %v743, %v743
    %v759 = vunpack.c.l.s4 1966171168
    %v760 = vunpack.c.0.s8 %v759
    %v761 = vlaneseq
    %v762 = vshrl.u32 %v761, 7
    %v763 = vsub.s32 %v760, %v762
    %v764 = vrot.slane %v757, %v763
    %765 = vrot.lane.b32.xlu0 %v764, 68
    %v766 = vpop.permute.xlu0 %765
    %v767 = vrot.slane %v766, 7
    %vm768 = vcmask 556032
    %v769 = vsel %vm768, %v767, %v766
    %vm771 = vcmp.ge.s32.totalorder %v752, 68
    %vm772 = vcmp.lt.s32.totalorder %v752, 264
    %vm773 = vmand %vm771, %vm772
    %s774 = scalar_lea.vmem [#allocation2], 2
    %775 = vst.msk [vmem:[%s774] ss:$2 sm:$0x7] %vm773, %v769
    %v776 = vcombine.high %v750, %v750
    %777 = vrot.lane.b32.xlu0 %v776, 8
    %v778 = vpop.permute.xlu0 %777
    %v779 = vrot.slane %v778, 7
    %vm780 = vcmask 64512
    %v781 = vsel %vm780, %v779, %v778
    %vm783 = vcmp.ge.s32.totalorder %v752, 8
    %vm784 = vcmp.lt.s32.totalorder %v752, 204
    %vm785 = vmand %vm783, %vm784
    %s786 = scalar_lea.vmem [#allocation2], 6
    %787 = vst.msk [vmem:[%s786] ss:$2 sm:$0x3] %vm785, %v781
    %s788 = scalar_lea.vmem %s0, 512
    %v789 = vld [vmem:[%s788] sm:$0xff]
    %v790 = vld [vmem:[%s788 + $0x8] sm:$0xff]
    %v791 = vld [vmem:[%s788 + $0x10] sm:$0xff]
    %v792 = vld [vmem:[%s788 + $0x18] sm:$0xff]
    %v793 = vld [vmem:[%s788 + $0x20] sm:$0xff]
    %v794 = vld [vmem:[%s788 + $0x28] sm:$0xff]
    %v795 = vld [vmem:[%s788 + $0x30] sm:$0xff]
    %v796 = vld [vmem:[%s788 + $0x38] sm:$0xff]
    %v797 = vld [vmem:[%s788 + $0x40] sm:$0xff]
    %v798 = vld [vmem:[%s788 + $0x48] sm:$0xff]
    %v799 = vld [vmem:[%s788 + $0x50] sm:$0xff]
    %v800 = vld [vmem:[%s788 + $0x58] sm:$0xff]
    %v801 = vld [vmem:[%s788 + $0x60] sm:$0xff]
    %v802 = vld [vmem:[%s788 + $0x68] sm:$0xff]
    %v803 = vld [vmem:[%s788 + $0x70] sm:$0xff]
    %v804 = vld [vmem:[%s788 + $0x78] sm:$0xff]
    %v805 = vld [vmem:[%s788 + $0x80] sm:$0xff]
    %v806 = vld [vmem:[%s788 + $0x88] sm:$0xff]
    %v807 = vld [vmem:[%s788 + $0x90] sm:$0xff]
    %v808 = vld [vmem:[%s788 + $0x98] sm:$0xff]
    %v809 = vld [vmem:[%s788 + $0xa0] sm:$0xff]
    %v810 = vld [vmem:[%s788 + $0xa8] sm:$0xff]
    %v811 = vld [vmem:[%s788 + $0xb0] sm:$0xff]
    %v812 = vld [vmem:[%s788 + $0xb8] sm:$0xff]
    %v813 = vld [vmem:[%s788 + $0xc0] sm:$0xff]
    %v814 = vld [vmem:[%s788 + $0xc8] sm:$0xff]
    %v815 = vld [vmem:[%s788 + $0xd0] sm:$0xff]
    %v816 = vld [vmem:[%s788 + $0xd8] sm:$0xff]
    %v817 = vld [vmem:[%s788 + $0xe0] sm:$0xff]
    %v818 = vld [vmem:[%s788 + $0xe8] sm:$0xff]
    %v819 = vld [vmem:[%s788 + $0xf0] sm:$0xff]
    %v820 = vld [vmem:[%s788 + $0xf8] sm:$0xff]
    %v821 = vld [vmem:[%s788 + $0x100] sm:$0xff]
    %v822 = vld [vmem:[%s788 + $0x108] sm:$0xff]
    %v823 = vld [vmem:[%s788 + $0x110] sm:$0xff]
    %v824 = vld [vmem:[%s788 + $0x118] sm:$0xff]
    %v825 = vld [vmem:[%s788 + $0x120] sm:$0xff]
    %v826 = vld [vmem:[%s788 + $0x128] sm:$0xff]
    %v827 = vld [vmem:[%s788 + $0x130] sm:$0xff]
    %v828 = vld [vmem:[%s788 + $0x138] sm:$0xff]
    %v829 = vld [vmem:[%s788 + $0x140] sm:$0xff]
    %v830 = vld [vmem:[%s788 + $0x148] sm:$0xff]
    %v831 = vld [vmem:[%s788 + $0x150] sm:$0xff]
    %v832 = vld [vmem:[%s788 + $0x158] sm:$0xff]
    %v833 = vld [vmem:[%s788 + $0x160] sm:$0xff]
    %v834 = vld [vmem:[%s788 + $0x168] sm:$0xff]
    %v835 = vld [vmem:[%s788 + $0x170] sm:$0xff]
    %v836 = vld [vmem:[%s788 + $0x178] sm:$0xff]
    %v837 = vld [vmem:[%s788 + $0x180] sm:$0xff]
    %v838 = vld [vmem:[%s788 + $0x188] sm:$0xff]
    %v839 = vld [vmem:[%s788 + $0x190] sm:$0xff]
    %v840 = vld [vmem:[%s788 + $0x198] sm:$0xff]
    %v841 = vld [vmem:[%s788 + $0x1a0] sm:$0xff]
    %v842 = vld [vmem:[%s788 + $0x1a8] sm:$0xff]
    %v843 = vld [vmem:[%s788 + $0x1b0] sm:$0xff]
    %v844 = vld [vmem:[%s788 + $0x1b8] sm:$0xff]
    %v845 = vld [vmem:[%s788 + $0x1c0] sm:$0xff]
    %v846 = vld [vmem:[%s788 + $0x1c8] sm:$0xff]
    %v847 = vld [vmem:[%s788 + $0x1d0] sm:$0xff]
    %v848 = vld [vmem:[%s788 + $0x1d8] sm:$0xff]
    %v849 = vld [vmem:[%s788 + $0x1e0] sm:$0xff]
    %v850 = vld [vmem:[%s788 + $0x1e8] sm:$0xff]
    %v851 = vld [vmem:[%s788 + $0x1f0] sm:$0xff]
    %v852 = vld [vmem:[%s788 + $0x1f8] sm:$0xff]
    %v917 = vunpack.c.l.b16 %v789
    %v918 = vunpack.c.h.b16 %v789
    %v919 = vunpack.c.l.b16 %v790
    %v920 = vunpack.c.h.b16 %v790
    %v921 = vunpack.c.l.b16 %v791
    %v922 = vunpack.c.h.b16 %v791
    %v923 = vunpack.c.l.b16 %v792
    %v924 = vunpack.c.h.b16 %v792
    %v925 = vunpack.c.l.b16 %v793
    %v926 = vunpack.c.h.b16 %v793
    %v927 = vunpack.c.l.b16 %v794
    %v928 = vunpack.c.h.b16 %v794
    %v929 = vunpack.c.l.b16 %v795
    %v930 = vunpack.c.h.b16 %v795
    %v931 = vunpack.c.l.b16 %v796
    %v932 = vunpack.c.h.b16 %v796
    %v933 = vunpack.c.l.b16 %v797
    %v934 = vunpack.c.h.b16 %v797
    %v935 = vunpack.c.l.b16 %v798
    %v936 = vunpack.c.h.b16 %v798
    %v937 = vunpack.c.l.b16 %v799
    %v938 = vunpack.c.h.b16 %v799
    %v939 = vunpack.c.l.b16 %v800
    %v940 = vunpack.c.h.b16 %v800
    %v941 = vunpack.c.l.b16 %v801
    %v942 = vunpack.c.h.b16 %v801
    %v943 = vunpack.c.l.b16 %v802
    %v944 = vunpack.c.h.b16 %v802
    %v945 = vunpack.c.l.b16 %v803
    %v946 = vunpack.c.h.b16 %v803
    %v947 = vunpack.c.l.b16 %v804
    %v948 = vunpack.c.h.b16 %v804
    %v949 = vunpack.c.l.b16 %v805
    %v950 = vunpack.c.h.b16 %v805
    %v951 = vunpack.c.l.b16 %v806
    %v952 = vunpack.c.h.b16 %v806
    %v953 = vunpack.c.l.b16 %v807
    %v954 = vunpack.c.h.b16 %v807
    %v955 = vunpack.c.l.b16 %v808
    %v956 = vunpack.c.h.b16 %v808
    %v957 = vunpack.c.l.b16 %v809
    %v958 = vunpack.c.h.b16 %v809
    %v959 = vunpack.c.l.b16 %v810
    %v960 = vunpack.c.h.b16 %v810
    %v961 = vunpack.c.l.b16 %v811
    %v962 = vunpack.c.h.b16 %v811
    %v963 = vunpack.c.l.b16 %v812
    %v964 = vunpack.c.h.b16 %v812
    %v965 = vunpack.c.l.b16 %v813
    %v966 = vunpack.c.h.b16 %v813
    %v967 = vunpack.c.l.b16 %v814
    %v968 = vunpack.c.h.b16 %v814
    %v969 = vunpack.c.l.b16 %v815
    %v970 = vunpack.c.h.b16 %v815
    %v971 = vunpack.c.l.b16 %v816
    %v972 = vunpack.c.h.b16 %v816
    %v973 = vunpack.c.l.b16 %v817
    %v974 = vunpack.c.h.b16 %v817
    %v975 = vunpack.c.l.b16 %v818
    %v976 = vunpack.c.h.b16 %v818
    %v977 = vunpack.c.l.b16 %v819
    %v978 = vunpack.c.h.b16 %v819
    %v979 = vunpack.c.l.b16 %v820
    %v980 = vunpack.c.h.b16 %v820
    %v981 = vunpack.c.l.b16 %v821
    %v982 = vunpack.c.h.b16 %v821
    %v983 = vunpack.c.l.b16 %v822
    %v984 = vunpack.c.h.b16 %v822
    %v985 = vunpack.c.l.b16 %v823
    %v986 = vunpack.c.h.b16 %v823
    %v987 = vunpack.c.l.b16 %v824
    %v988 = vunpack.c.h.b16 %v824
    %v989 = vunpack.c.l.b16 %v825
    %v990 = vunpack.c.h.b16 %v825
    %v991 = vunpack.c.l.b16 %v826
    %v992 = vunpack.c.h.b16 %v826
    %v993 = vunpack.c.l.b16 %v827
    %v994 = vunpack.c.h.b16 %v827
    %v995 = vunpack.c.l.b16 %v828
    %v996 = vunpack.c.h.b16 %v828
    %v997 = vunpack.c.l.b16 %v829
    %v998 = vunpack.c.h.b16 %v829
    %v999 = vunpack.c.l.b16 %v830
    %v1000 = vunpack.c.h.b16 %v830
    %v1001 = vunpack.c.l.b16 %v831
    %v1002 = vunpack.c.h.b16 %v831
    %v1003 = vunpack.c.l.b16 %v832
    %v1004 = vunpack.c.h.b16 %v832
    %v1005 = vunpack.c.l.b16 %v833
    %v1006 = vunpack.c.h.b16 %v833
    %v1007 = vunpack.c.l.b16 %v834
    %v1008 = vunpack.c.h.b16 %v834
    %v1009 = vunpack.c.l.b16 %v835
    %v1010 = vunpack.c.h.b16 %v835
    %v1011 = vunpack.c.l.b16 %v836
    %v1012 = vunpack.c.h.b16 %v836
    %v1013 = vunpack.c.l.b16 %v837
    %v1014 = vunpack.c.h.b16 %v837
    %v1015 = vunpack.c.l.b16 %v838
    %v1016 = vunpack.c.h.b16 %v838
    %v1017 = vunpack.c.l.b16 %v839
    %v1018 = vunpack.c.h.b16 %v839
    %v1019 = vunpack.c.l.b16 %v840
    %v1020 = vunpack.c.h.b16 %v840
    %v1021 = vunpack.c.l.b16 %v841
    %v1022 = vunpack.c.h.b16 %v841
    %v1023 = vunpack.c.l.b16 %v842
    %v1024 = vunpack.c.h.b16 %v842
    %v1025 = vunpack.c.l.b16 %v843
    %v1026 = vunpack.c.h.b16 %v843
    %v1027 = vunpack.c.l.b16 %v844
    %v1028 = vunpack.c.h.b16 %v844
    %v1029 = vunpack.c.l.b16 %v845
    %v1030 = vunpack.c.h.b16 %v845
    %v1031 = vunpack.c.l.b16 %v846
    %v1032 = vunpack.c.h.b16 %v846
    %v1033 = vunpack.c.l.b16 %v847
    %v1034 = vunpack.c.h.b16 %v847
    %v1035 = vunpack.c.l.b16 %v848
    %v1036 = vunpack.c.h.b16 %v848
    %v1037 = vunpack.c.l.b16 %v849
    %v1038 = vunpack.c.h.b16 %v849
    %v1039 = vunpack.c.l.b16 %v850
    %v1040 = vunpack.c.h.b16 %v850
    %v1041 = vunpack.c.l.b16 %v851
    %v1042 = vunpack.c.h.b16 %v851
    %v1043 = vunpack.c.l.b16 %v852
    %v1044 = vunpack.c.h.b16 %v852
    %v1045 = vpack.c.b16 %v919, %v917
    %v1046 = vpack.c.b16 %v920, %v918
    %v1047 = vpack.c.b16 %v923, %v921
    %v1048 = vpack.c.b16 %v924, %v922
    %v1049 = vpack.c.b16 %v927, %v925
    %v1050 = vpack.c.b16 %v928, %v926
    %v1051 = vpack.c.b16 %v931, %v929
    %v1052 = vpack.c.b16 %v932, %v930
    %v1053 = vpack.c.b16 %v935, %v933
    %v1054 = vpack.c.b16 %v936, %v934
    %v1055 = vpack.c.b16 %v939, %v937
    %v1056 = vpack.c.b16 %v940, %v938
    %v1057 = vpack.c.b16 %v943, %v941
    %v1058 = vpack.c.b16 %v944, %v942
    %v1059 = vpack.c.b16 %v947, %v945
    %v1060 = vpack.c.b16 %v948, %v946
    %v1061 = vpack.c.b16 %v951, %v949
    %v1062 = vpack.c.b16 %v952, %v950
    %v1063 = vpack.c.b16 %v955, %v953
    %v1064 = vpack.c.b16 %v956, %v954
    %v1065 = vpack.c.b16 %v959, %v957
    %v1066 = vpack.c.b16 %v960, %v958
    %v1067 = vpack.c.b16 %v963, %v961
    %v1068 = vpack.c.b16 %v964, %v962
    %v1069 = vpack.c.b16 %v967, %v965
    %v1070 = vpack.c.b16 %v968, %v966
    %v1071 = vpack.c.b16 %v971, %v969
    %v1072 = vpack.c.b16 %v972, %v970
    %v1073 = vpack.c.b16 %v975, %v973
    %v1074 = vpack.c.b16 %v976, %v974
    %v1075 = vpack.c.b16 %v979, %v977
    %v1076 = vpack.c.b16 %v980, %v978
    %v1077 = vpack.c.b16 %v983, %v981
    %v1078 = vpack.c.b16 %v984, %v982
    %v1079 = vpack.c.b16 %v987, %v985
    %v1080 = vpack.c.b16 %v988, %v986
    %v1081 = vpack.c.b16 %v991, %v989
    %v1082 = vpack.c.b16 %v992, %v990
    %v1083 = vpack.c.b16 %v995, %v993
    %v1084 = vpack.c.b16 %v996, %v994
    %v1085 = vpack.c.b16 %v999, %v997
    %v1086 = vpack.c.b16 %v1000, %v998
    %v1087 = vpack.c.b16 %v1003, %v1001
    %v1088 = vpack.c.b16 %v1004, %v1002
    %v1089 = vpack.c.b16 %v1007, %v1005
    %v1090 = vpack.c.b16 %v1008, %v1006
    %v1091 = vpack.c.b16 %v1011, %v1009
    %v1092 = vpack.c.b16 %v1012, %v1010
    %v1093 = vpack.c.b16 %v1015, %v1013
    %v1094 = vpack.c.b16 %v1016, %v1014
    %v1095 = vpack.c.b16 %v1019, %v1017
    %v1096 = vpack.c.b16 %v1020, %v1018
    %v1097 = vpack.c.b16 %v1023, %v1021
    %v1098 = vpack.c.b16 %v1024, %v1022
    %v1099 = vpack.c.b16 %v1027, %v1025
    %v1100 = vpack.c.b16 %v1028, %v1026
    %v1101 = vpack.c.b16 %v1031, %v1029
    %v1102 = vpack.c.b16 %v1032, %v1030
    %v1103 = vpack.c.b16 %v1035, %v1033
    %v1104 = vpack.c.b16 %v1036, %v1034
    %v1105 = vpack.c.b16 %v1039, %v1037
    %v1106 = vpack.c.b16 %v1040, %v1038
    %v1107 = vpack.c.b16 %v1043, %v1041
    %v1108 = vpack.c.b16 %v1044, %v1042
    %1173 = vmatprep.subr.bf16.mxu0 %v1046
    %1174 = vmatpush1.bf16.msra.mxu0 %v1045
    %1175 = vmatprep.subr.bf16.mxu0 %v1048
    %1176 = vmatpush1.bf16.msra.mxu0 %v1047
    %1177 = vmatprep.subr.bf16.mxu0 %v1050
    %1178 = vmatpush1.bf16.msra.mxu0 %v1049
    %1179 = vmatprep.subr.bf16.mxu0 %v1052
    %1180 = vmatpush1.bf16.msra.mxu0 %v1051
    %1181 = vmatprep.subr.bf16.mxu0 %v1054
    %1182 = vmatpush1.bf16.msra.mxu0 %v1053
    %1183 = vmatprep.subr.bf16.mxu0 %v1056
    %1184 = vmatpush1.bf16.msra.mxu0 %v1055
    %1185 = vmatprep.subr.bf16.mxu0 %v1058
    %1186 = vmatpush1.bf16.msra.mxu0 %v1057
    %1187 = vmatprep.subr.bf16.mxu0 %v1060
    %1188 = vmatpush1.bf16.msra.mxu0 %v1059
    %1189 = vmatprep.subr.bf16.mxu0 %v1062
    %1190 = vmatpush1.bf16.msra.mxu0 %v1061
    %1191 = vmatprep.subr.bf16.mxu0 %v1064
    %1192 = vmatpush1.bf16.msra.mxu0 %v1063
    %1193 = vmatprep.subr.bf16.mxu0 %v1066
    %1194 = vmatpush1.bf16.msra.mxu0 %v1065
    %1195 = vmatprep.subr.bf16.mxu0 %v1068
    %1196 = vmatpush1.bf16.msra.mxu0 %v1067
    %1197 = vmatprep.subr.bf16.mxu0 %v1070
    %1198 = vmatpush1.bf16.msra.mxu0 %v1069
    %1199 = vmatprep.subr.bf16.mxu0 %v1072
    %1200 = vmatpush1.bf16.msra.mxu0 %v1071
    %1201 = vmatprep.subr.bf16.mxu0 %v1074
    %1202 = vmatpush1.bf16.msra.mxu0 %v1073
    %1203 = vmatprep.subr.bf16.mxu0 %v1076
    %1204 = vmatpush1.bf16.msra.mxu0 %v1075
    %1205 = vmatprep.mubr.bf16.mxu0 %v169
    %1206 = vmatmul.mubr.bf16.gmra.mrb[0].mxu0 %v168
    %v1207 = vpop.f32.mrb[0].mxu0
    %v1208 = vadd.f32 %v116, %v1207
    %v1209 = vpop.f32.mrb[0].mxu0
    %v1210 = vadd.f32 %v116, %v1209
    %v1211 = vpop.f32.mrb[0].mxu0
    %v1212 = vadd.f32 %v121, %v1211
    %v1213 = vpop.f32.mrb[0].mxu0
    %v1214 = vadd.f32 %v121, %v1213
    %1215 = vmatprep.mubr.bf16.mxu0 %v173
    %1216 = vmatmul.mubr.bf16.gmra.mrb[0].mxu0 %v172
    %v1217 = vpop.f32.mrb[0].mxu0
    %v1218 = vadd.f32 %v126, %v1217
    %v1219 = vpop.f32.mrb[0].mxu0
    %v1220 = vadd.f32 %v126, %v1219
    %v1221 = vpop.f32.mrb[0].mxu0
    %v1222 = vadd.f32 %v131, %v1221
    %v1223 = vpop.f32.mrb[0].mxu0
    %v1224 = vadd.f32 %v131, %v1223
    %1225 = vmatprep.mubr.bf16.mxu0 %v177
    %1226 = vmatmul.mubr.bf16.gmra.mrb[0].mxu0 %v176
    %v1227 = vpop.f32.mrb[0].mxu0
    %v1228 = vadd.f32 %v136, %v1227
    %v1229 = vpop.f32.mrb[0].mxu0
    %v1230 = vadd.f32 %v136, %v1229
    %v1231 = vpop.f32.mrb[0].mxu0
    %v1232 = vpop.f32.mrb[0].mxu0
    %1233 = vdwg.mxu0
    %1234 = vmatprep.subr.bf16.mxu0 %v1078
    %1235 = vmatpush1.bf16.msra.mxu0 %v1077
    %1236 = vmatprep.subr.bf16.mxu0 %v1080
    %1237 = vmatpush1.bf16.msra.mxu0 %v1079
    %1238 = vmatprep.subr.bf16.mxu0 %v1082
    %1239 = vmatpush1.bf16.msra.mxu0 %v1081
    %1240 = vmatprep.subr.bf16.mxu0 %v1084
    %1241 = vmatpush1.bf16.msra.mxu0 %v1083
    %1242 = vmatprep.subr.bf16.mxu0 %v1086
    %1243 = vmatpush1.bf16.msra.mxu0 %v1085
    %1244 = vmatprep.subr.bf16.mxu0 %v1088
    %1245 = vmatpush1.bf16.msra.mxu0 %v1087
    %1246 = vmatprep.subr.bf16.mxu0 %v1090
    %1247 = vmatpush1.bf16.msra.mxu0 %v1089
    %1248 = vmatprep.subr.bf16.mxu0 %v1092
    %1249 = vmatpush1.bf16.msra.mxu0 %v1091
    %1250 = vmatprep.subr.bf16.mxu0 %v1094
    %1251 = vmatpush1.bf16.msra.mxu0 %v1093
    %1252 = vmatprep.subr.bf16.mxu0 %v1096
    %1253 = vmatpush1.bf16.msra.mxu0 %v1095
    %1254 = vmatprep.subr.bf16.mxu0 %v1098
    %1255 = vmatpush1.bf16.msra.mxu0 %v1097
    %1256 = vmatprep.subr.bf16.mxu0 %v1100
    %1257 = vmatpush1.bf16.msra.mxu0 %v1099
    %1258 = vmatprep.subr.bf16.mxu0 %v1102
    %1259 = vmatpush1.bf16.msra.mxu0 %v1101
    %1260 = vmatprep.subr.bf16.mxu0 %v1104
    %1261 = vmatpush1.bf16.msra.mxu0 %v1103
    %1262 = vmatprep.subr.bf16.mxu0 %v1106
    %1263 = vmatpush1.bf16.msra.mxu0 %v1105
    %1264 = vmatprep.subr.bf16.mxu0 %v1108
    %1265 = vmatpush1.bf16.msra.mxu0 %v1107
    %1266 = vmatprep.mubr.bf16.mxu0 %v171
    %1267 = vmatmul.mubr.bf16.gmra.mrb[0].mxu0 %v170
    %v1268 = vpop.f32.mrb[0].mxu0
    %v1269 = vadd.f32 %v1208, %v1268
    %v1270 = vpop.f32.mrb[0].mxu0
    %v1271 = vadd.f32 %v1210, %v1270
    %v1272 = vpop.f32.mrb[0].mxu0
    %v1273 = vadd.f32 %v1212, %v1272
    %v1274 = vpop.f32.mrb[0].mxu0
    %v1275 = vadd.f32 %v1214, %v1274
    %1276 = vmatprep.mubr.bf16.mxu0 %v175
    %1277 = vmatmul.mubr.bf16.gmra.mrb[0].mxu0 %v174
    %v1278 = vpop.f32.mrb[0].mxu0
    %v1279 = vadd.f32 %v1218, %v1278
    %v1280 = vpop.f32.mrb[0].mxu0
    %v1281 = vadd.f32 %v1220, %v1280
    %v1282 = vpop.f32.mrb[0].mxu0
    %v1283 = vadd.f32 %v1222, %v1282
    %v1284 = vpop.f32.mrb[0].mxu0
    %v1285 = vadd.f32 %v1224, %v1284
    %1286 = vmatprep.mubr.bf16.mxu0 %v179
    %1287 = vmatmul.mubr.bf16.gmra.mrb[0].mxu0 %v178
    %v1288 = vpop.f32.mrb[0].mxu0
    %v1289 = vadd.f32 %v1228, %v1288
    %v1290 = vpop.f32.mrb[0].mxu0
    %v1291 = vadd.f32 %v1230, %v1290
    %v1292 = vpop.f32.mrb[0].mxu0
    %v1293 = vpop.f32.mrb[0].mxu0
    %1294 = vdwg.mxu0
    %v1295 = vmax.f32 %v1269, 0.0
    %v1296 = vmax.f32 %v1271, 0.0
    %v1297 = vmax.f32 %v1273, 0.0
    %v1298 = vmax.f32 %v1275, 0.0
    %v1299 = vmax.f32 %v1279, 0.0
    %v1300 = vmax.f32 %v1281, 0.0
    %v1301 = vmax.f32 %v1283, 0.0
    %v1302 = vmax.f32 %v1285, 0.0
    %v1303 = vmax.f32 %v1289, 0.0
    %v1304 = vmax.f32 %v1291, 0.0
    %s1305 = scalar_lea.vmem %s1, 4
    %v1306 = vld [vmem:[%s1305] sm:$0x7]
    %1308 = vset.pattern.permute.xlu0 0
    %1309 = vperm.xlu0 %1308, %v1306
    %v1310 = vpop.permute.xlu0 %1309
    %v1313 = vsel %vm654, %v1303, 0
    %v1316 = vsel %vm654, %v1304, 0
    %1318 = vmatprep.subr.mxu0 %v1296
    %1319 = vmatpush1.msra.mxu0 %v1295
    %1320 = vmatprep.subr.mxu0 %v1298
    %1321 = vmatpush1.msra.mxu0 %v1297
    %1322 = vmatprep.subr.mxu0 %v1300
    %1323 = vmatpush1.msra.mxu0 %v1299
    %1324 = vmatprep.subr.mxu0 %v1302
    %1325 = vmatpush1.msra.mxu0 %v1301
    %1326 = vmatprep.subr.mxu0 %v1316
    %1327 = vmatpush1.msra.mxu0 %v1313
    %1328 = vmatprep.subr.mxu0 0.0
    %1329 = vmatpush1.msra.mxu0 0.0
    %1330 = vmatprep.subr.mxu0 0.0
    %1331 = vmatpush1.msra.mxu0 0.0
    %1332 = vmatprep.subr.mxu0 0.0
    %1333 = vmatpush1.msra.mxu0 0.0
    %1334 = vmatprep.subr.mxu0 0.0
    %1335 = vmatpush1.msra.mxu0 0.0
    %1336 = vmatprep.subr.mxu0 0.0
    %1337 = vmatpush1.msra.mxu0 0.0
    %1338 = vmatprep.subr.mxu0 0.0
    %1339 = vmatpush1.msra.mxu0 0.0
    %1340 = vmatprep.subr.mxu0 0.0
    %1341 = vmatpush1.msra.mxu0 0.0
    %1342 = vmatprep.subr.mxu0 0.0
    %1343 = vmatpush1.msra.mxu0 0.0
    %1344 = vmatprep.subr.mxu0 0.0
    %1345 = vmatpush1.msra.mxu0 0.0
    %1346 = vmatprep.subr.mxu0 0.0
    %1347 = vmatpush1.msra.mxu0 0.0
    %1348 = vmatprep.subr.mxu0 0.0
    %1349 = vmatpush1.msra.mxu0 0.0
    %1350 = vmatprep.subr.mxu0 0.0
    %1351 = vmatpush1.msra.mxu0 0.0
    %1352 = vmatprep.subr.mxu0 0.0
    %1353 = vmatpush1.msra.mxu0 0.0
    %1354 = vmatprep.subr.mxu0 0.0
    %1355 = vmatpush1.msra.mxu0 0.0
    %1356 = vmatprep.subr.mxu0 0.0
    %1357 = vmatpush1.msra.mxu0 0.0
    %1358 = vmatprep.subr.mxu0 0.0
    %1359 = vmatpush1.msra.mxu0 0.0
    %1360 = vmatprep.subr.mxu0 0.0
    %1361 = vmatpush1.msra.mxu0 0.0
    %1362 = vmatprep.subr.mxu0 0.0
    %1363 = vmatpush1.msra.mxu0 0.0
    %1364 = vmatprep.subr.mxu0 0.0
    %1365 = vmatpush1.msra.mxu0 0.0
    %1366 = vmatprep.subr.mxu0 0.0
    %1367 = vmatpush1.msra.mxu0 0.0
    %1368 = vmatprep.subr.mxu0 0.0
    %1369 = vmatpush1.msra.mxu0 0.0
    %1370 = vmatprep.subr.mxu0 0.0
    %1371 = vmatpush1.msra.mxu0 0.0
    %1372 = vmatprep.subr.mxu0 0.0
    %1373 = vmatpush1.msra.mxu0 0.0
    %1374 = vmatprep.subr.mxu0 0.0
    %1375 = vmatpush1.msra.mxu0 0.0
    %1376 = vmatprep.subr.mxu0 0.0
    %1377 = vmatpush1.msra.mxu0 0.0
    %1378 = vmatprep.subr.mxu0 0.0
    %1379 = vmatpush1.msra.mxu0 0.0
    %1380 = vmatprep.subr.mxu0 0.0
    %1381 = vmatpush1.msra.mxu0 0.0
    %1382 = vmatprep.mubr.f32.mxu0 0.0
    %1383 = vmatmul.mubr.f32.gmra.mrb[0].mxu0 %v652
    %v1384 = vpop.f32.mrb[0].mxu0
    %v1385 = vadd.f32 %v1310, %v1384
    %v1386 = vpop.f32.mrb[0].mxu0
    %v1387 = vadd.f32 %v1310, %v1386
    %1388 = vdwg.mxu0
    %v1389 = vmax.f32 %v1385, 0.0
    %v1390 = vmax.f32 %v1387, 0.0
    %v1393 = vcombine.low %v1389, %v1390
    %v1395 = vunpack.c.l.s4 1966171168
    %v1396 = vunpack.c.0.s8 %v1395
    %v1397 = vlaneseq
    %v1398 = vshrl.u32 %v1397, 7
    %v1399 = vsub.s32 %v1396, %v1398
    %v1400 = vrot.slane %v1393, %v1399
    %v1402 = vunpack.c.l.s4 1966171168
    %v1403 = vunpack.c.0.s8 %v1402
    %v1404 = vlaneseq
    %v1405 = vshrl.u32 %v1404, 7
    %v1406 = vsub.s32 %v1403, %v1405
    %v1407 = vrot.slane %v1400, %v1406
    %s1409 = scalar_lea.vmem [#allocation2], 1
    %1410 = vst.msk [vmem:[%s1409] ss:$2 sm:$0x3] %vm755, %v1407
    %v1411 = vcombine.high %v1400, %v1400
    %v1413 = vunpack.c.l.s4 1966171168
    %v1414 = vunpack.c.0.s8 %v1413
    %v1415 = vlaneseq
    %v1416 = vshrl.u32 %v1415, 7
    %v1417 = vsub.s32 %v1414, %v1416
    %v1418 = vrot.slane %v1411, %v1417
    %1419 = vrot.lane.b32.xlu0 %v1418, 68
    %v1420 = vpop.permute.xlu0 %1419
    %v1421 = vrot.slane %v1420, 7
    %v1422 = vsel %vm768, %v1421, %v1420
    %s1424 = scalar_lea.vmem [#allocation2], 3
    %1425 = vst.msk [vmem:[%s1424] ss:$2 sm:$0x7] %vm773, %v1422
    %v1426 = vcombine.high %v1407, %v1407
    %1427 = vrot.lane.b32.xlu0 %v1426, 8
    %v1428 = vpop.permute.xlu0 %1427
    %v1429 = vrot.slane %v1428, 7
    %v1430 = vsel %vm780, %v1429, %v1428
    %s1432 = scalar_lea.vmem [#allocation2], 7
    %1433 = vst.msk [vmem:[%s1432] ss:$2 sm:$0x3] %vm785, %v1430
    %v1434 = vld [vmem:[#allocation2] sm:$0xff]
    %v1435 = vld [vmem:[#allocation2 + $0x8] sm:$0x3]
    %v1436 = vld [vmem:[%s5] sm:$0xff]
    %v1437 = vld [vmem:[%s5 + $0x8] sm:$0xff]
    %v1438 = vld [vmem:[%s5 + $0x10] sm:$0xff]
    %v1439 = vld [vmem:[%s5 + $0x18] sm:$0xff]
    %v1440 = vld [vmem:[%s5 + $0x20] sm:$0xff]
    %v1441 = vld [vmem:[%s5 + $0x28] sm:$0xff]
    %v1442 = vld [vmem:[%s5 + $0x30] sm:$0xff]
    %v1443 = vld [vmem:[%s5 + $0x38] sm:$0xff]
    %v1444 = vld [vmem:[%s5 + $0x40] sm:$0xff]
    %v1445 = vld [vmem:[%s5 + $0x48] sm:$0xff]
    %v1446 = vld [vmem:[%s5 + $0x50] sm:$0xff]
    %v1447 = vld [vmem:[%s5 + $0x58] sm:$0xff]
    %v1448 = vld [vmem:[%s5 + $0x60] sm:$0xff]
    %v1449 = vld [vmem:[%s5 + $0x68] sm:$0xff]
    %v1450 = vld [vmem:[%s5 + $0x70] sm:$0xff]
    %v1451 = vld [vmem:[%s5 + $0x78] sm:$0xff]
    %v1452 = vld [vmem:[%s5 + $0x80] sm:$0xff]
    %v1453 = vld [vmem:[%s5 + $0x88] sm:$0xff]
    %v1454 = vld [vmem:[%s5 + $0x90] sm:$0xff]
    %v1455 = vld [vmem:[%s5 + $0x98] sm:$0xff]
    %v1456 = vld [vmem:[%s5 + $0xa0] sm:$0xff]
    %v1457 = vld [vmem:[%s5 + $0xa8] sm:$0xff]
    %v1458 = vld [vmem:[%s5 + $0xb0] sm:$0xff]
    %v1459 = vld [vmem:[%s5 + $0xb8] sm:$0xff]
    %v1460 = vld [vmem:[%s5 + $0xc0] sm:$0xff]
    %v1461 = vld [vmem:[%s5 + $0xc8] sm:$0xff]
    %v1462 = vld [vmem:[%s5 + $0xd0] sm:$0xff]
    %v1463 = vld [vmem:[%s5 + $0xd8] sm:$0xff]
    %v1464 = vld [vmem:[%s5 + $0xe0] sm:$0xff]
    %v1465 = vld [vmem:[%s5 + $0xe8] sm:$0xff]
    %v1466 = vld [vmem:[%s5 + $0xf0] sm:$0xff]
    %v1467 = vld [vmem:[%s5 + $0xf8] sm:$0xff]
    %v1468 = vld [vmem:[%s5 + $0x100] sm:$0xff]
    %v1469 = vld [vmem:[%s5 + $0x108] sm:$0xff]
    %v1470 = vld [vmem:[%s5 + $0x110] sm:$0xff]
    %v1471 = vld [vmem:[%s5 + $0x118] sm:$0xff]
    %v1472 = vld [vmem:[%s5 + $0x120] sm:$0xff]
    %v1473 = vld [vmem:[%s5 + $0x128] sm:$0xff]
    %v1474 = vld [vmem:[%s5 + $0x130] sm:$0xff]
    %v1475 = vld [vmem:[%s5 + $0x138] sm:$0xff]
    %v1476 = vld [vmem:[%s5 + $0x140] sm:$0xff]
    %v1477 = vld [vmem:[%s5 + $0x148] sm:$0xff]
    %v1478 = vld [vmem:[%s5 + $0x150] sm:$0xff]
    %v1479 = vld [vmem:[%s5 + $0x158] sm:$0xff]
    %v1480 = vld [vmem:[%s5 + $0x160] sm:$0xff]
    %v1481 = vld [vmem:[%s5 + $0x168] sm:$0xff]
    %v1482 = vld [vmem:[%s5 + $0x170] sm:$0xff]
    %v1483 = vld [vmem:[%s5 + $0x178] sm:$0xff]
    %v1484 = vld [vmem:[%s5 + $0x180] sm:$0xff]
    %v1485 = vld [vmem:[%s5 + $0x188] sm:$0xff]
    %v1486 = vld [vmem:[%s5 + $0x190] sm:$0xff]
    %v1487 = vld [vmem:[%s5 + $0x198] sm:$0xff]
    %v1488 = vld [vmem:[%s5 + $0x1a0] sm:$0xff]
    %v1489 = vld [vmem:[%s5 + $0x1a8] sm:$0xff]
    %v1490 = vld [vmem:[%s5 + $0x1b0] sm:$0xff]
    %v1491 = vld [vmem:[%s5 + $0x1b8] sm:$0xff]
    %v1492 = vld [vmem:[%s5 + $0x1c0] sm:$0xff]
    %v1493 = vld [vmem:[%s5 + $0x1c8] sm:$0xff]
    %v1494 = vld [vmem:[%s5 + $0x1d0] sm:$0xff]
    %v1495 = vld [vmem:[%s5 + $0x1d8] sm:$0xff]
    %v1496 = vld [vmem:[%s5 + $0x1e0] sm:$0xff]
    %v1497 = vld [vmem:[%s5 + $0x1e8] sm:$0xff]
    %v1498 = vld [vmem:[%s5 + $0x1f0] sm:$0xff]
    %v1499 = vld [vmem:[%s5 + $0x1f8] sm:$0xff]
    %v1500 = vld [vmem:[%s5 + $0x200] sm:$0xff]
    %v1501 = vld [vmem:[%s5 + $0x208] sm:$0xff]
    %v1502 = vld [vmem:[%s5 + $0x210] sm:$0xff]
    %v1503 = vld [vmem:[%s5 + $0x218] sm:$0xff]
    %v1504 = vld [vmem:[%s5 + $0x220] sm:$0xff]
    %v1505 = vld [vmem:[%s5 + $0x228] sm:$0xff]
    %v1506 = vld [vmem:[%s5 + $0x230] sm:$0xff]
    %v1507 = vld [vmem:[%s5 + $0x238] sm:$0xff]
    %v1508 = vld [vmem:[%s5 + $0x240] sm:$0xff]
    %v1509 = vld [vmem:[%s5 + $0x248] sm:$0xf]
    %v1510 = vld [vmem:[%s6] sm:$0x1]
    %v1512 = vlaneseq
    %v1513 = vshrl.u32 %v1512, 7
    %v1514 = vsub.s32 0, %v1513
    %v1515 = vrot.slane %v1510, %v1514
    %v1519 = vcombine.high %v1434, %v1434
    %v1521 = vunpack.c.l.s4 1983009808
    %v1522 = vunpack.c.0.s8 %v1521
    %v1523 = vlaneseq
    %v1524 = vshrl.u32 %v1523, 7
    %v1525 = vsub.s32 %v1522, %v1524
    %v1526 = vrot.slane %v1434, %v1525
    %v1528 = vunpack.c.l.s4 1983009808
    %v1529 = vunpack.c.0.s8 %v1528
    %v1530 = vlaneseq
    %v1531 = vshrl.u32 %v1530, 7
    %v1532 = vsub.s32 %v1529, %v1531
    %v1533 = vrot.slane %v1519, %v1532
    %v1534 = vcombine.high %v1526, %v1526
    %v1535 = vcombine.high %v1533, %v1533
    %v1537 = vunpack.c.l.s4 1983009808
    %v1538 = vunpack.c.0.s8 %v1537
    %v1539 = vlaneseq
    %v1540 = vshrl.u32 %v1539, 7
    %v1541 = vsub.s32 %v1538, %v1540
    %v1542 = vrot.slane %v1435, %v1541
    %vm1547 = vcmask 621568
    %v1548 = vsel %vm1547, %v1542, 0
    %v1551 = vsel %vm654, %v1509, 0
    %1553 = vmatprep.subr.mxu0 0.0
    %1554 = vmatpush1.msra.mxu0 %v1436
    %1555 = vmatprep.subr.mxu0 0.0
    %1556 = vmatpush1.msra.mxu0 %v1437
    %1557 = vmatprep.subr.mxu0 0.0
    %1558 = vmatpush1.msra.mxu0 %v1438
    %1559 = vmatprep.subr.mxu0 0.0
    %1560 = vmatpush1.msra.mxu0 %v1439
    %1561 = vmatprep.subr.mxu0 0.0
    %1562 = vmatpush1.msra.mxu0 %v1440
    %1563 = vmatprep.subr.mxu0 0.0
    %1564 = vmatpush1.msra.mxu0 %v1441
    %1565 = vmatprep.subr.mxu0 0.0
    %1566 = vmatpush1.msra.mxu0 %v1442
    %1567 = vmatprep.subr.mxu0 0.0
    %1568 = vmatpush1.msra.mxu0 %v1443
    %1569 = vmatprep.subr.mxu0 0.0
    %1570 = vmatpush1.msra.mxu0 %v1444
    %1571 = vmatprep.subr.mxu0 0.0
    %1572 = vmatpush1.msra.mxu0 %v1445
    %1573 = vmatprep.subr.mxu0 0.0
    %1574 = vmatpush1.msra.mxu0 %v1446
    %1575 = vmatprep.subr.mxu0 0.0
    %1576 = vmatpush1.msra.mxu0 %v1447
    %1577 = vmatprep.subr.mxu0 0.0
    %1578 = vmatpush1.msra.mxu0 %v1448
    %1579 = vmatprep.subr.mxu0 0.0
    %1580 = vmatpush1.msra.mxu0 %v1449
    %1581 = vmatprep.subr.mxu0 0.0
    %1582 = vmatpush1.msra.mxu0 %v1450
    %1583 = vmatprep.subr.mxu0 0.0
    %1584 = vmatpush1.msra.mxu0 %v1451
    %1585 = vmatprep.subr.mxu0 0.0
    %1586 = vmatpush1.msra.mxu0 %v1452
    %1587 = vmatprep.subr.mxu0 0.0
    %1588 = vmatpush1.msra.mxu0 %v1453
    %1589 = vmatprep.subr.mxu0 0.0
    %1590 = vmatpush1.msra.mxu0 %v1454
    %1591 = vmatprep.subr.mxu0 0.0
    %1592 = vmatpush1.msra.mxu0 %v1455
    %1593 = vmatprep.subr.mxu0 0.0
    %1594 = vmatpush1.msra.mxu0 %v1456
    %1595 = vmatprep.subr.mxu0 0.0
    %1596 = vmatpush1.msra.mxu0 %v1457
    %1597 = vmatprep.subr.mxu0 0.0
    %1598 = vmatpush1.msra.mxu0 %v1458
    %1599 = vmatprep.subr.mxu0 0.0
    %1600 = vmatpush1.msra.mxu0 %v1459
    %1601 = vmatprep.subr.mxu0 0.0
    %1602 = vmatpush1.msra.mxu0 %v1460
    %1603 = vmatprep.subr.mxu0 0.0
    %1604 = vmatpush1.msra.mxu0 %v1461
    %1605 = vmatprep.subr.mxu0 0.0
    %1606 = vmatpush1.msra.mxu0 %v1462
    %1607 = vmatprep.subr.mxu0 0.0
    %1608 = vmatpush1.msra.mxu0 %v1463
    %1609 = vmatprep.subr.mxu0 0.0
    %1610 = vmatpush1.msra.mxu0 %v1464
    %1611 = vmatprep.subr.mxu0 0.0
    %1612 = vmatpush1.msra.mxu0 %v1465
    %1613 = vmatprep.subr.mxu0 0.0
    %1614 = vmatpush1.msra.mxu0 %v1466
    %1615 = vmatprep.subr.mxu0 0.0
    %1616 = vmatpush1.msra.mxu0 %v1467
    %1617 = vmatprep.mubr.f32.mxu0 %v1534
    %1618 = vmatmul.mubr.f32.gmra.mrb[0].mxu0 %v1526
    %v1619 = vpop.f32.mrb[0].mxu0
    %v1620 = vadd.f32 %v1515, %v1619
    %v1621 = vpop.f32.mrb[0].mxu0
    %1622 = vdwg.mxu0
    %1623 = vmatprep.subr.mxu0 0.0
    %1624 = vmatpush1.msra.mxu0 %v1468
    %1625 = vmatprep.subr.mxu0 0.0
    %1626 = vmatpush1.msra.mxu0 %v1469
    %1627 = vmatprep.subr.mxu0 0.0
    %1628 = vmatpush1.msra.mxu0 %v1470
    %1629 = vmatprep.subr.mxu0 0.0
    %1630 = vmatpush1.msra.mxu0 %v1471
    %1631 = vmatprep.subr.mxu0 0.0
    %1632 = vmatpush1.msra.mxu0 %v1472
    %1633 = vmatprep.subr.mxu0 0.0
    %1634 = vmatpush1.msra.mxu0 %v1473
    %1635 = vmatprep.subr.mxu0 0.0
    %1636 = vmatpush1.msra.mxu0 %v1474
    %1637 = vmatprep.subr.mxu0 0.0
    %1638 = vmatpush1.msra.mxu0 %v1475
    %1639 = vmatprep.subr.mxu0 0.0
    %1640 = vmatpush1.msra.mxu0 %v1476
    %1641 = vmatprep.subr.mxu0 0.0
    %1642 = vmatpush1.msra.mxu0 %v1477
    %1643 = vmatprep.subr.mxu0 0.0
    %1644 = vmatpush1.msra.mxu0 %v1478
    %1645 = vmatprep.subr.mxu0 0.0
    %1646 = vmatpush1.msra.mxu0 %v1479
    %1647 = vmatprep.subr.mxu0 0.0
    %1648 = vmatpush1.msra.mxu0 %v1480
    %1649 = vmatprep.subr.mxu0 0.0
    %1650 = vmatpush1.msra.mxu0 %v1481
    %1651 = vmatprep.subr.mxu0 0.0
    %1652 = vmatpush1.msra.mxu0 %v1482
    %1653 = vmatprep.subr.mxu0 0.0
    %1654 = vmatpush1.msra.mxu0 %v1483
    %1655 = vmatprep.subr.mxu0 0.0
    %1656 = vmatpush1.msra.mxu0 %v1484
    %1657 = vmatprep.subr.mxu0 0.0
    %1658 = vmatpush1.msra.mxu0 %v1485
    %1659 = vmatprep.subr.mxu0 0.0
    %1660 = vmatpush1.msra.mxu0 %v1486
    %1661 = vmatprep.subr.mxu0 0.0
    %1662 = vmatpush1.msra.mxu0 %v1487
    %1663 = vmatprep.subr.mxu0 0.0
    %1664 = vmatpush1.msra.mxu0 %v1488
    %1665 = vmatprep.subr.mxu0 0.0
    %1666 = vmatpush1.msra.mxu0 %v1489
    %1667 = vmatprep.subr.mxu0 0.0
    %1668 = vmatpush1.msra.mxu0 %v1490
    %1669 = vmatprep.subr.mxu0 0.0
    %1670 = vmatpush1.msra.mxu0 %v1491
    %1671 = vmatprep.subr.mxu0 0.0
    %1672 = vmatpush1.msra.mxu0 %v1492
    %1673 = vmatprep.subr.mxu0 0.0
    %1674 = vmatpush1.msra.mxu0 %v1493
    %1675 = vmatprep.subr.mxu0 0.0
    %1676 = vmatpush1.msra.mxu0 %v1494
    %1677 = vmatprep.subr.mxu0 0.0
    %1678 = vmatpush1.msra.mxu0 %v1495
    %1679 = vmatprep.subr.mxu0 0.0
    %1680 = vmatpush1.msra.mxu0 %v1496
    %1681 = vmatprep.subr.mxu0 0.0
    %1682 = vmatpush1.msra.mxu0 %v1497
    %1683 = vmatprep.subr.mxu0 0.0
    %1684 = vmatpush1.msra.mxu0 %v1498
    %1685 = vmatprep.subr.mxu0 0.0
    %1686 = vmatpush1.msra.mxu0 %v1499
    %1687 = vmatprep.mubr.f32.mxu0 %v1535
    %1688 = vmatmul.mubr.f32.gmra.mrb[0].mxu0 %v1533
    %v1689 = vpop.f32.mrb[0].mxu0
    %v1690 = vadd.f32 %v1620, %v1689
    %v1691 = vpop.f32.mrb[0].mxu0
    %1692 = vdwg.mxu0
    %1693 = vmatprep.subr.mxu0 0.0
    %1694 = vmatpush1.msra.mxu0 %v1500
    %1695 = vmatprep.subr.mxu0 0.0
    %1696 = vmatpush1.msra.mxu0 %v1501
    %1697 = vmatprep.subr.mxu0 0.0
    %1698 = vmatpush1.msra.mxu0 %v1502
    %1699 = vmatprep.subr.mxu0 0.0
    %1700 = vmatpush1.msra.mxu0 %v1503
    %1701 = vmatprep.subr.mxu0 0.0
    %1702 = vmatpush1.msra.mxu0 %v1504
    %1703 = vmatprep.subr.mxu0 0.0
    %1704 = vmatpush1.msra.mxu0 %v1505
    %1705 = vmatprep.subr.mxu0 0.0
    %1706 = vmatpush1.msra.mxu0 %v1506
    %1707 = vmatprep.subr.mxu0 0.0
    %1708 = vmatpush1.msra.mxu0 %v1507
    %1709 = vmatprep.subr.mxu0 0.0
    %1710 = vmatpush1.msra.mxu0 %v1508
    %1711 = vmatprep.subr.mxu0 0.0
    %1712 = vmatpush1.msra.mxu0 %v1551
    %1713 = vmatprep.subr.mxu0 0.0
    %1714 = vmatpush1.msra.mxu0 0.0
    %1715 = vmatprep.subr.mxu0 0.0
    %1716 = vmatpush1.msra.mxu0 0.0
    %1717 = vmatprep.subr.mxu0 0.0
    %1718 = vmatpush1.msra.mxu0 0.0
    %1719 = vmatprep.subr.mxu0 0.0
    %1720 = vmatpush1.msra.mxu0 0.0
    %1721 = vmatprep.subr.mxu0 0.0
    %1722 = vmatpush1.msra.mxu0 0.0
    %1723 = vmatprep.subr.mxu0 0.0
    %1724 = vmatpush1.msra.mxu0 0.0
    %1725 = vmatprep.subr.mxu0 0.0
    %1726 = vmatpush1.msra.mxu0 0.0
    %1727 = vmatprep.subr.mxu0 0.0
    %1728 = vmatpush1.msra.mxu0 0.0
    %1729 = vmatprep.subr.mxu0 0.0
    %1730 = vmatpush1.msra.mxu0 0.0
    %1731 = vmatprep.subr.mxu0 0.0
    %1732 = vmatpush1.msra.mxu0 0.0
    %1733 = vmatprep.subr.mxu0 0.0
    %1734 = vmatpush1.msra.mxu0 0.0
    %1735 = vmatprep.subr.mxu0 0.0
    %1736 = vmatpush1.msra.mxu0 0.0
    %1737 = vmatprep.subr.mxu0 0.0
    %1738 = vmatpush1.msra.mxu0 0.0
    %1739 = vmatprep.subr.mxu0 0.0
    %1740 = vmatpush1.msra.mxu0 0.0
    %1741 = vmatprep.subr.mxu0 0.0
    %1742 = vmatpush1.msra.mxu0 0.0
    %1743 = vmatprep.subr.mxu0 0.0
    %1744 = vmatpush1.msra.mxu0 0.0
    %1745 = vmatprep.subr.mxu0 0.0
    %1746 = vmatpush1.msra.mxu0 0.0
    %1747 = vmatprep.subr.mxu0 0.0
    %1748 = vmatpush1.msra.mxu0 0.0
    %1749 = vmatprep.subr.mxu0 0.0
    %1750 = vmatpush1.msra.mxu0 0.0
    %1751 = vmatprep.subr.mxu0 0.0
    %1752 = vmatpush1.msra.mxu0 0.0
    %1753 = vmatprep.subr.mxu0 0.0
    %1754 = vmatpush1.msra.mxu0 0.0
    %1755 = vmatprep.subr.mxu0 0.0
    %1756 = vmatpush1.msra.mxu0 0.0
    %1757 = vmatprep.mubr.f32.mxu0 0.0
    %1758 = vmatmul.mubr.f32.gmra.mrb[0].mxu0 %v1548
    %v1759 = vpop.f32.mrb[0].mxu0
    %v1760 = vadd.f32 %v1690, %v1759
    %v1761 = vpop.f32.mrb[0].mxu0
    %1762 = vdwg.mxu0
    %v1763 = vmax.f32 %v1760, 0.0
    %v1764 = vld [vmem:[%s7] sm:$0xff]
    %v1765 = vld [vmem:[%s7 + $0x8] sm:$0xff]
    %v1766 = vld [vmem:[%s7 + $0x10] sm:$0xff]
    %v1767 = vld [vmem:[%s7 + $0x18] sm:$0xff]
    %v1768 = vld [vmem:[%s7 + $0x20] sm:$0xff]
    %v1769 = vld [vmem:[%s7 + $0x28] sm:$0xff]
    %v1770 = vld [vmem:[%s7 + $0x30] sm:$0xff]
    %v1771 = vld [vmem:[%s7 + $0x38] sm:$0xff]
    %v1772 = vld [vmem:[%s7 + $0x40] sm:$0xff]
    %v1773 = vld [vmem:[%s8] sm:$0x1]
    %v1775 = vlaneseq
    %v1776 = vshrl.u32 %v1775, 7
    %v1777 = vsub.s32 0, %v1776
    %v1778 = vrot.slane %v1773, %v1777
    %vm1780 = vcmask 588800
    %v1782 = vsel %vm1780, %v1763, 0
    %1784 = vmatprep.subr.mxu0 0.0
    %1785 = vmatpush1.msra.mxu0 %v1764
    %1786 = vmatprep.subr.mxu0 0.0
    %1787 = vmatpush1.msra.mxu0 %v1765
    %1788 = vmatprep.subr.mxu0 0.0
    %1789 = vmatpush1.msra.mxu0 %v1766
    %1790 = vmatprep.subr.mxu0 0.0
    %1791 = vmatpush1.msra.mxu0 %v1767
    %1792 = vmatprep.subr.mxu0 0.0
    %1793 = vmatpush1.msra.mxu0 %v1768
    %1794 = vmatprep.subr.mxu0 0.0
    %1795 = vmatpush1.msra.mxu0 %v1769
    %1796 = vmatprep.subr.mxu0 0.0
    %1797 = vmatpush1.msra.mxu0 %v1770
    %1798 = vmatprep.subr.mxu0 0.0
    %1799 = vmatpush1.msra.mxu0 %v1771
    %1800 = vmatprep.subr.mxu0 0.0
    %1801 = vmatpush1.msra.mxu0 %v1772
    %1802 = vmatprep.subr.mxu0 0.0
    %1803 = vmatpush1.msra.mxu0 0.0
    %1804 = vmatprep.subr.mxu0 0.0
    %1805 = vmatpush1.msra.mxu0 0.0
    %1806 = vmatprep.subr.mxu0 0.0
    %1807 = vmatpush1.msra.mxu0 0.0
    %1808 = vmatprep.subr.mxu0 0.0
    %1809 = vmatpush1.msra.mxu0 0.0
    %1810 = vmatprep.subr.mxu0 0.0
    %1811 = vmatpush1.msra.mxu0 0.0
    %1812 = vmatprep.subr.mxu0 0.0
    %1813 = vmatpush1.msra.mxu0 0.0
    %1814 = vmatprep.subr.mxu0 0.0
    %1815 = vmatpush1.msra.mxu0 0.0
    %1816 = vmatprep.subr.mxu0 0.0
    %1817 = vmatpush1.msra.mxu0 0.0
    %1818 = vmatprep.subr.mxu0 0.0
    %1819 = vmatpush1.msra.mxu0 0.0
    %1820 = vmatprep.subr.mxu0 0.0
    %1821 = vmatpush1.msra.mxu0 0.0
    %1822 = vmatprep.subr.mxu0 0.0
    %1823 = vmatpush1.msra.mxu0 0.0
    %1824 = vmatprep.subr.mxu0 0.0
    %1825 = vmatpush1.msra.mxu0 0.0
    %1826 = vmatprep.subr.mxu0 0.0
    %1827 = vmatpush1.msra.mxu0 0.0
    %1828 = vmatprep.subr.mxu0 0.0
    %1829 = vmatpush1.msra.mxu0 0.0
    %1830 = vmatprep.subr.mxu0 0.0
    %1831 = vmatpush1.msra.mxu0 0.0
    %1832 = vmatprep.subr.mxu0 0.0
    %1833 = vmatpush1.msra.mxu0 0.0
    %1834 = vmatprep.subr.mxu0 0.0
    %1835 = vmatpush1.msra.mxu0 0.0
    %1836 = vmatprep.subr.mxu0 0.0
    %1837 = vmatpush1.msra.mxu0 0.0
    %1838 = vmatprep.subr.mxu0 0.0
    %1839 = vmatpush1.msra.mxu0 0.0
    %1840 = vmatprep.subr.mxu0 0.0
    %1841 = vmatpush1.msra.mxu0 0.0
    %1842 = vmatprep.subr.mxu0 0.0
    %1843 = vmatpush1.msra.mxu0 0.0
    %1844 = vmatprep.subr.mxu0 0.0
    %1845 = vmatpush1.msra.mxu0 0.0
    %1846 = vmatprep.subr.mxu0 0.0
    %1847 = vmatpush1.msra.mxu0 0.0
    %1848 = vmatprep.mubr.f32.mxu0 0.0
    %1849 = vmatmul.mubr.f32.gmra.mrb[0].mxu0 %v1782
    %v1850 = vpop.f32.mrb[0].mxu0
    %v1851 = vadd.f32 %v1778, %v1850
    %v1852 = vpop.f32.mrb[0].mxu0
    %1853 = vdwg.mxu0
    %vm1854 = vcmask 287744
    %1855 = vst.msk [vmem:[#allocation3] sm:$0x3] %vm1854, %v1851
    // Predicated region
    $region38: #{tpu_custom_call.1} parent=1 // pred_check
      _
    $region39: #{tpu_custom_call.1} parent=1 // pred_check_branch
      %1857 = sbr.rel (0) target = $region41
    $region40: #{tpu_custom_call.1} parent=1 // pred_region
      %s1859 = ssub.s32 32, 32
      %1860 = vsyncadd [#allocation4], %s1859
      %s1862 = sshll.u32 [#allocation3], 4
      %s1863 = int_to_ptr.vmem [resolvable:$true] %s1862
      %1865 = dma.vmem_to_hbm [thread:$0]  %s1863, 32, %s9, [#allocation4]
    $region41: #{tpu_custom_call.1} parent=1 // pred_fallthru
      _
    // Predicated region
    $region42: #{tpu_custom_call.1} parent=1 // pred_check
      _
    $region43: #{tpu_custom_call.1} parent=1 // pred_check_branch
      %1867 = sbr.rel (0) target = $region45
    $region44: #{tpu_custom_call.1} parent=1 // pred_region
      %1868 = dma.done [#allocation4], 32
    $region45: #{tpu_custom_call.1} parent=1 // pred_fallthru
      _
    %1869 = vsyncpa [#allocation4], 1

</llo_original>
